<compile_context>
chip_gen: v7x
topology: tpu7x:2x2x1
jax: 0.10.0
libtpu: 0.0.40
codegen_flags: <defaults>
</compile_context>

<pallas_src>
import functools

import jax
import jax.numpy as jnp
from jax import lax
from jax.experimental import pallas as pl
from jax.experimental.pallas import tpu as pltpu


# ---------------------------------------------------------------------------
# Pallas kernel: one LSTM layer, both directions fused, time loop internal
# ---------------------------------------------------------------------------
def _bilstm_layer_kernel(len_ref, g_ref, whh_ref, out_ref, hfin_ref,
                         *, hidden_dim, seq_len):
    """Grid axis = direction (0=fwd, 1=bwd), marked "parallel" (independent).

    len_ref : (Bp, 1) int32   per-batch valid lengths (padded rows = 0)
    g_ref   : (T, Bp, 4H) f32 precomputed x @ W_ih^T + bias for this direction
    whh_ref : (H, 4H)   bf16  recurrent weights (transposed) for this direction
    out_ref : (T, Bp, H) f32  hidden sequence (zero past each length)
    hfin_ref: (Bp, H)   f32   final hidden state of this direction
    """
    H, T = hidden_dim, seq_len
    d = pl.program_id(0)                         # 0 = forward, 1 = backward
    lengths = len_ref[...]                       # (Bp, 1) int32
    Bp = lengths.shape[0]

    def step(t, carry):
        h, c = carry
        # actual (un-reversed) time index for this direction
        tt = jnp.where(d == 0, t, T - 1 - t)

        # recurrent part only; input projection was hoisted out of the kernel
        gates = g_ref[tt] + jnp.dot(h.astype(jnp.bfloat16), whh_ref[...],
                                    preferred_element_type=jnp.float32)

        i_g = jax.nn.sigmoid(gates[:, 0 * H:1 * H])
        f_g = jax.nn.sigmoid(gates[:, 1 * H:2 * H])
        g_g = jnp.tanh(gates[:, 2 * H:3 * H])
        o_g = jax.nn.sigmoid(gates[:, 3 * H:4 * H])

        c_new = f_g * c + i_g * g_g
        h_new = o_g * jnp.tanh(c_new)

        mask = tt < lengths                      # (Bp, 1) packed-sequence mask
        h = jnp.where(mask, h_new, h)
        c = jnp.where(mask, c_new, c)
        out_ref[tt] = jnp.where(mask, h_new, jnp.zeros_like(h_new))
        return h, c

    z = jnp.zeros((Bp, H), jnp.float32)
    h_last, _ = lax.fori_loop(0, T, step, (z, z), unroll=True)
    hfin_ref[...] = h_last


def bilstm_layer(lengths_b1, gates, whh_t, *, seq_len, batch_p, hidden_dim):
    """gates: (2, T, Bp, 4H) f32, whh_t: (2, H, 4H) bf16.

    Returns (out_seq (2, T, Bp, H) f32, h_fin (2, Bp, H) f32).
    """
    T, Bp, H = seq_len, batch_p, hidden_dim
    kernel = functools.partial(_bilstm_layer_kernel, hidden_dim=H, seq_len=T)
    out_seq, h_fin = pl.pallas_call(
        kernel,
        out_shape=(jax.ShapeDtypeStruct((2, T, Bp, H), jnp.float32),
                   jax.ShapeDtypeStruct((2, Bp, H), jnp.float32)),
        grid_spec=pltpu.PrefetchScalarGridSpec(
            num_scalar_prefetch=0,
            grid=(2,),                                           # direction axis
            in_specs=[
                pl.BlockSpec((Bp, 1), lambda d: (0, 0)),             # lengths
                pl.BlockSpec((None, T, Bp, 4 * H), lambda d: (d, 0, 0, 0)),  # gates
                pl.BlockSpec((None, H, 4 * H), lambda d: (d, 0, 0)),         # W_hh^T
            ],
            out_specs=[
                pl.BlockSpec((None, T, Bp, H), lambda d: (d, 0, 0, 0)),      # hidden seq
                pl.BlockSpec((None, Bp, H), lambda d: (d, 0, 0)),            # final hidden
            ],
        ),
        compiler_params=pltpu.CompilerParams(
            dimension_semantics=("parallel",)),   # 2 TCs on v7x, loop elsewhere
    )(lengths_b1, gates, whh_t)
    return out_seq, h_fin


# ---------------------------------------------------------------------------
# Parameter init (shapes match nn.Embedding / nn.LSTM / nn.Linear) and one-time
# weight preparation (transpose / bias-combine / bf16 cast done ONCE).
# ---------------------------------------------------------------------------
def init_params(key, vocab_size, embedding_dim, hidden_dim, output_dim, n_layers):
    params = {"n_layers": n_layers, "hidden_dim": hidden_dim}
    k_emb, k_lstm, k_fc = jax.random.split(key, 3)

    params["embedding"] = jax.random.normal(
        k_emb, (vocab_size, embedding_dim), jnp.float32)

    kH = 1.0 / jnp.sqrt(hidden_dim)
    lkeys = jax.random.split(k_lstm, n_layers * 2 * 4)
    idx = 0
    for layer in range(n_layers):
        in_dim = embedding_dim if layer == 0 else 2 * hidden_dim
        for d in range(2):  # 0=forward, 1=backward
            name = f"l{layer}_d{d}"
            params[name + "_w_ih"] = jax.random.uniform(
                lkeys[idx], (4 * hidden_dim, in_dim), jnp.float32, -kH, kH); idx += 1
            params[name + "_w_hh"] = jax.random.uniform(
                lkeys[idx], (4 * hidden_dim, hidden_dim), jnp.float32, -kH, kH); idx += 1
            params[name + "_b_ih"] = jax.random.uniform(
                lkeys[idx], (4 * hidden_dim,), jnp.float32, -kH, kH); idx += 1
            params[name + "_b_hh"] = jax.random.uniform(
                lkeys[idx], (4 * hidden_dim,), jnp.float32, -kH, kH); idx += 1

    kF = 1.0 / jnp.sqrt(2 * hidden_dim)
    k_fw, k_fb = jax.random.split(k_fc)
    params["fc_w"] = jax.random.uniform(
        k_fw, (output_dim, 2 * hidden_dim), jnp.float32, -kF, kF)
    params["fc_b"] = jax.random.uniform(
        k_fb, (output_dim,), jnp.float32, -kF, kF)
    return params


def prepare_params(params):
    """One-time weight prep: transpose, combine biases, bf16 matmul operands."""
    prep = {
        "embedding": params["embedding"],
        "fc_wT": jnp.transpose(params["fc_w"]),          # (2H, O)
        "fc_b": params["fc_b"],
        "n_layers": params["n_layers"],
        "hidden_dim": params["hidden_dim"],
        "layers": [],
    }
    for layer in range(params["n_layers"]):
        wih_t, whh_t, bias = [], [], []
        for d in range(2):
            k = f"l{layer}_d{d}"
            wih_t.append(jnp.transpose(params[k + "_w_ih"]).astype(jnp.bfloat16))
            whh_t.append(jnp.transpose(params[k + "_w_hh"]).astype(jnp.bfloat16))
            bias.append(params[k + "_b_ih"] + params[k + "_b_hh"])
        prep["layers"].append({
            "wih_t": jnp.stack(wih_t),   # (2, I, 4H) bf16
            "whh_t": jnp.stack(whh_t),   # (2, H, 4H) bf16
            "bias":  jnp.stack(bias),    # (2, 4H)    f32
        })
    return prep


# ---------------------------------------------------------------------------
# Forward pass (equivalent of LSTMNet.forward, eval mode)
# ---------------------------------------------------------------------------
def lstm_net_forward(prep, text, text_lengths):
    # embedding lookup (glue: plain JAX gather)
    emb = jnp.take(prep["embedding"], text, axis=0)            # (B, T, E)
    B, T, _ = emb.shape
    H = prep["hidden_dim"]
    Bp = ((B + 7) // 8) * 8                                    # pad to sublane width

    x = jnp.transpose(emb, (1, 0, 2)).astype(jnp.float32)      # (T, B, E) time-major
    lengths = text_lengths.astype(jnp.int32)
    if Bp != B:
        x = jnp.pad(x, ((0, 0), (0, Bp - B), (0, 0)))
        lengths = jnp.pad(lengths, (0, Bp - B))                # pad rows: length 0
    lengths = lengths.reshape(Bp, 1)

    layer_in = x
    h_fin = None
    for lw in prep["layers"]:
        # Hoisted input projection: one large (T*Bp, I) x (I, 4H) matmul per
        # direction (bf16 operands, f32 accumulate), bias folded in.
        gates = jnp.einsum(
            "tbi,dig->dtbg",
            layer_in.astype(jnp.bfloat16), lw["wih_t"],
            preferred_element_type=jnp.float32) + lw["bias"][:, None, None, :]
        out2, h_fin = bilstm_layer(lengths, gates, lw["whh_t"],
                                   seq_len=T, batch_p=Bp, hidden_dim=H)
        layer_in = jnp.concatenate([out2[0], out2[1]], axis=-1)  # (T, Bp, 2H)
        # TODO(synk): inter-layer dropout is training-only; eval semantics used here.

    # hidden_state[-2] (last layer fwd) and hidden_state[-1] (last layer bwd)
    hidden = jnp.concatenate([h_fin[0, :B], h_fin[1, :B]], axis=-1)   # (B, 2H)
    # final fc + sigmoid: tiny (B,2H)x(2H,1); plain JAX per perf review.
    logits = hidden @ prep["fc_wT"] + prep["fc_b"]
    return jax.nn.sigmoid(logits)


# ---------------------------------------------------------------------------
if __name__ == "__main__":
    vocab_size, embedding_dim, hidden_dim, output_dim = 50, 32, 32, 1
    n_layers, batch, seq = 2, 2, 8

    root = jax.random.PRNGKey(0)
    k_params, k_text = jax.random.split(root)

    raw_params = init_params(k_params, vocab_size, embedding_dim,
                             hidden_dim, output_dim, n_layers)
    prep = prepare_params(raw_params)

    text = jax.random.randint(k_text, (batch, seq), 0, vocab_size, jnp.int32)
    # pack_padded_sequence default requires lengths sorted descending
    text_lengths = jnp.array([8, 5], dtype=jnp.int32)

    out = lstm_net_forward(prep, text, text_lengths)   # (batch, output_dim)
    jax.block_until_ready(out)
    assert out.shape == (batch, output_dim)
    print("KERNEL_OK")
</pallas_src>

<mosaic_0001>
module attributes {stable_mosaic.version = 11 : i64} {
  func.func @_bilstm_layer_kernel(%arg0: i32, %arg1: memref<8x1xi32, #tpu.memory_space<vmem>>, %arg2: memref<1x8x8x128xf32, #tpu.memory_space<vmem>>, %arg3: memref<1x32x128xbf16, #tpu.memory_space<vmem>>, %arg4: memref<1x8x8x32xf32, #tpu.memory_space<vmem>>, %arg5: memref<1x8x32xf32, #tpu.memory_space<vmem>>) attributes {dimension_semantics = [#tpu.dimension_semantics<parallel>], iteration_bounds = array<i64: 2>, scalar_prefetch = 0 : i64, scratch_operands = 0 : i64, tpu.core_type = #tpu.core_type<tc>, window_params = [{pipeline_mode = #tpu.pipeline_mode<synchronous>, transform_indices = @transform_0, window_bounds = array<i64: 8, 1>}, {transform_indices = @transform_1, window_bounds = array<i64: 1, 8, 8, 128>}, {transform_indices = @transform_2, window_bounds = array<i64: 1, 32, 128>}, {transform_indices = @transform_3, window_bounds = array<i64: 1, 8, 8, 32>}, {transform_indices = @transform_4, window_bounds = array<i64: 1, 8, 32>}]} {
    %c0 = arith.constant 0 : index
    %c0_0 = arith.constant 0 : index
    %0 = vector.load %arg1[%c0, %c0_0] : memref<8x1xi32, #tpu.memory_space<vmem>>, vector<8x1xi32>
    %cst = arith.constant 0.000000e+00 : f32
    %1 = vector.broadcast %cst : f32 to vector<8x32xf32>
    %c0_i32 = arith.constant 0 : i32
    %c0_i32_1 = arith.constant 0 : i32
    %2 = arith.cmpi eq, %arg0, %c0_i32_1 : i32
    %c7_i32 = arith.constant 7 : i32
    %3 = arith.subi %c7_i32, %c0_i32 : i32
    %4 = arith.select %2, %c0_i32, %3 : i32
    %c0_2 = arith.constant 0 : index
    %5 = arith.index_cast %4 : i32 to index
    %c0_3 = arith.constant 0 : index
    %c0_4 = arith.constant 0 : index
    %6 = vector.load %arg2[%c0_2, %5, %c0_3, %c0_4] : memref<1x8x8x128xf32, #tpu.memory_space<vmem>>, vector<1x1x8x128xf32>
    %7 = vector.shape_cast %6 : vector<1x1x8x128xf32> to vector<8x128xf32>
    %8 = arith.truncf %1 : vector<8x32xf32> to vector<8x32xbf16>
    %c0_5 = arith.constant 0 : index
    %c0_6 = arith.constant 0 : index
    %c0_7 = arith.constant 0 : index
    %9 = vector.load %arg3[%c0_5, %c0_6, %c0_7] : memref<1x32x128xbf16, #tpu.memory_space<vmem>>, vector<1x32x128xbf16>
    %10 = vector.shape_cast %9 : vector<1x32x128xbf16> to vector<32x128xbf16>
    %cst_8 = arith.constant dense<0.000000e+00> : vector<8x128xf32>
    %11 = tpu.matmul %8, %10, %cst_8 {dimension_numbers = #tpu.dot_dimension_numbers<[1], [0], [0], [1], [0, 0, 1, 1], [], []>} : vector<8x32xbf16>, vector<32x128xbf16>, vector<8x128xf32> -> vector<8x128xf32>
    %12 = arith.addf %7, %11 : vector<8x128xf32>
    %13 = vector.extract_strided_slice %12 {offsets = [0, 0], sizes = [8, 32], strides = [1, 1]} : vector<8x128xf32> to vector<8x32xf32>
    %14 = arith.negf %13 : vector<8x32xf32>
    %15 = math.exp %14 : vector<8x32xf32>
    %cst_9 = arith.constant 1.000000e+00 : f32
    %16 = vector.broadcast %cst_9 : f32 to vector<8x32xf32>
    %17 = arith.addf %16, %15 : vector<8x32xf32>
    %18 = arith.divf %16, %17 : vector<8x32xf32>
    %19 = vector.extract_strided_slice %12 {offsets = [0, 32], sizes = [8, 32], strides = [1, 1]} : vector<8x128xf32> to vector<8x32xf32>
    %20 = arith.negf %19 : vector<8x32xf32>
    %21 = math.exp %20 : vector<8x32xf32>
    %cst_10 = arith.constant 1.000000e+00 : f32
    %22 = vector.broadcast %cst_10 : f32 to vector<8x32xf32>
    %23 = arith.addf %22, %21 : vector<8x32xf32>
    %24 = arith.divf %22, %23 : vector<8x32xf32>
    %25 = vector.extract_strided_slice %12 {offsets = [0, 64], sizes = [8, 32], strides = [1, 1]} : vector<8x128xf32> to vector<8x32xf32>
    %26 = math.tanh %25 : vector<8x32xf32>
    %27 = vector.extract_strided_slice %12 {offsets = [0, 96], sizes = [8, 32], strides = [1, 1]} : vector<8x128xf32> to vector<8x32xf32>
    %28 = arith.negf %27 : vector<8x32xf32>
    %29 = math.exp %28 : vector<8x32xf32>
    %cst_11 = arith.constant 1.000000e+00 : f32
    %30 = vector.broadcast %cst_11 : f32 to vector<8x32xf32>
    %31 = arith.addf %30, %29 : vector<8x32xf32>
    %32 = arith.divf %30, %31 : vector<8x32xf32>
    %33 = arith.mulf %24, %1 : vector<8x32xf32>
    %34 = arith.mulf %18, %26 : vector<8x32xf32>
    %35 = arith.addf %33, %34 : vector<8x32xf32>
    %36 = math.tanh %35 : vector<8x32xf32>
    %37 = arith.mulf %32, %36 : vector<8x32xf32>
    %38 = vector.broadcast %4 : i32 to vector<8x1xi32>
    %39 = arith.cmpi slt, %38, %0 : vector<8x1xi32>
    %40 = vector.shape_cast %39 : vector<8x1xi1> to vector<8x1xi1>
    %41 = vector.broadcast %40 : vector<8x1xi1> to vector<8x32xi1>
    %42 = arith.select %41, %37, %1 : vector<8x32xi1>, vector<8x32xf32>
    %43 = vector.shape_cast %39 : vector<8x1xi1> to vector<8x1xi1>
    %44 = vector.broadcast %43 : vector<8x1xi1> to vector<8x32xi1>
    %45 = arith.select %44, %35, %1 : vector<8x32xi1>, vector<8x32xf32>
    %cst_12 = arith.constant 0.000000e+00 : f32
    %46 = vector.broadcast %cst_12 : f32 to vector<8x32xf32>
    %47 = vector.shape_cast %39 : vector<8x1xi1> to vector<8x1xi1>
    %48 = vector.broadcast %47 : vector<8x1xi1> to vector<8x32xi1>
    %49 = arith.select %48, %37, %46 : vector<8x32xi1>, vector<8x32xf32>
    %c0_13 = arith.constant 0 : index
    %50 = arith.index_cast %4 : i32 to index
    %c0_14 = arith.constant 0 : index
    %c0_15 = arith.constant 0 : index
    %51 = vector.load %arg4[%c0_13, %50, %c0_14, %c0_15] : memref<1x8x8x32xf32, #tpu.memory_space<vmem>>, vector<1x1x8x32xf32>
    %52 = vector.shape_cast %51 : vector<1x1x8x32xf32> to vector<8x32xf32>
    %53 = vector.shape_cast %49 : vector<8x32xf32> to vector<1x1x8x32xf32>
    tpu.vector_store %arg4[%c0_13, %50, %c0_14, %c0_15], %53 {strides = array<i32>} : memref<1x8x8x32xf32, #tpu.memory_space<vmem>>, vector<1x1x8x32xf32>,
    %c1_i32 = arith.constant 1 : i32
    %c0_i32_16 = arith.constant 0 : i32
    %54 = arith.cmpi eq, %arg0, %c0_i32_16 : i32
    %c7_i32_17 = arith.constant 7 : i32
    %55 = arith.subi %c7_i32_17, %c1_i32 : i32
    %56 = arith.select %54, %c1_i32, %55 : i32
    %c0_18 = arith.constant 0 : index
    %57 = arith.index_cast %56 : i32 to index
    %c0_19 = arith.constant 0 : index
    %c0_20 = arith.constant 0 : index
    %58 = vector.load %arg2[%c0_18, %57, %c0_19, %c0_20] : memref<1x8x8x128xf32, #tpu.memory_space<vmem>>, vector<1x1x8x128xf32>
    %59 = vector.shape_cast %58 : vector<1x1x8x128xf32> to vector<8x128xf32>
    %60 = arith.truncf %42 : vector<8x32xf32> to vector<8x32xbf16>
    %c0_21 = arith.constant 0 : index
    %c0_22 = arith.constant 0 : index
    %c0_23 = arith.constant 0 : index
    %61 = vector.load %arg3[%c0_21, %c0_22, %c0_23] : memref<1x32x128xbf16, #tpu.memory_space<vmem>>, vector<1x32x128xbf16>
    %62 = vector.shape_cast %61 : vector<1x32x128xbf16> to vector<32x128xbf16>
    %cst_24 = arith.constant dense<0.000000e+00> : vector<8x128xf32>
    %63 = tpu.matmul %60, %62, %cst_24 {dimension_numbers = #tpu.dot_dimension_numbers<[1], [0], [0], [1], [0, 0, 1, 1], [], []>} : vector<8x32xbf16>, vector<32x128xbf16>, vector<8x128xf32> -> vector<8x128xf32>
    %64 = arith.addf %59, %63 : vector<8x128xf32>
    %65 = vector.extract_strided_slice %64 {offsets = [0, 0], sizes = [8, 32], strides = [1, 1]} : vector<8x128xf32> to vector<8x32xf32>
    %66 = arith.negf %65 : vector<8x32xf32>
    %67 = math.exp %66 : vector<8x32xf32>
    %cst_25 = arith.constant 1.000000e+00 : f32
    %68 = vector.broadcast %cst_25 : f32 to vector<8x32xf32>
    %69 = arith.addf %68, %67 : vector<8x32xf32>
    %70 = arith.divf %68, %69 : vector<8x32xf32>
    %71 = vector.extract_strided_slice %64 {offsets = [0, 32], sizes = [8, 32], strides = [1, 1]} : vector<8x128xf32> to vector<8x32xf32>
    %72 = arith.negf %71 : vector<8x32xf32>
    %73 = math.exp %72 : vector<8x32xf32>
    %cst_26 = arith.constant 1.000000e+00 : f32
    %74 = vector.broadcast %cst_26 : f32 to vector<8x32xf32>
    %75 = arith.addf %74, %73 : vector<8x32xf32>
    %76 = arith.divf %74, %75 : vector<8x32xf32>
    %77 = vector.extract_strided_slice %64 {offsets = [0, 64], sizes = [8, 32], strides = [1, 1]} : vector<8x128xf32> to vector<8x32xf32>
    %78 = math.tanh %77 : vector<8x32xf32>
    %79 = vector.extract_strided_slice %64 {offsets = [0, 96], sizes = [8, 32], strides = [1, 1]} : vector<8x128xf32> to vector<8x32xf32>
    %80 = arith.negf %79 : vector<8x32xf32>
    %81 = math.exp %80 : vector<8x32xf32>
    %cst_27 = arith.constant 1.000000e+00 : f32
    %82 = vector.broadcast %cst_27 : f32 to vector<8x32xf32>
    %83 = arith.addf %82, %81 : vector<8x32xf32>
    %84 = arith.divf %82, %83 : vector<8x32xf32>
    %85 = arith.mulf %76, %45 : vector<8x32xf32>
    %86 = arith.mulf %70, %78 : vector<8x32xf32>
    %87 = arith.addf %85, %86 : vector<8x32xf32>
    %88 = math.tanh %87 : vector<8x32xf32>
    %89 = arith.mulf %84, %88 : vector<8x32xf32>
    %90 = vector.broadcast %56 : i32 to vector<8x1xi32>
    %91 = arith.cmpi slt, %90, %0 : vector<8x1xi32>
    %92 = vector.shape_cast %91 : vector<8x1xi1> to vector<8x1xi1>
    %93 = vector.broadcast %92 : vector<8x1xi1> to vector<8x32xi1>
    %94 = arith.select %93, %89, %42 : vector<8x32xi1>, vector<8x32xf32>
    %95 = vector.shape_cast %91 : vector<8x1xi1> to vector<8x1xi1>
    %96 = vector.broadcast %95 : vector<8x1xi1> to vector<8x32xi1>
    %97 = arith.select %96, %87, %45 : vector<8x32xi1>, vector<8x32xf32>
    %cst_28 = arith.constant 0.000000e+00 : f32
    %98 = vector.broadcast %cst_28 : f32 to vector<8x32xf32>
    %99 = vector.shape_cast %91 : vector<8x1xi1> to vector<8x1xi1>
    %100 = vector.broadcast %99 : vector<8x1xi1> to vector<8x32xi1>
    %101 = arith.select %100, %89, %98 : vector<8x32xi1>, vector<8x32xf32>
    %c0_29 = arith.constant 0 : index
    %102 = arith.index_cast %56 : i32 to index
    %c0_30 = arith.constant 0 : index
    %c0_31 = arith.constant 0 : index
    %103 = vector.load %arg4[%c0_29, %102, %c0_30, %c0_31] : memref<1x8x8x32xf32, #tpu.memory_space<vmem>>, vector<1x1x8x32xf32>
    %104 = vector.shape_cast %103 : vector<1x1x8x32xf32> to vector<8x32xf32>
    %105 = vector.shape_cast %101 : vector<8x32xf32> to vector<1x1x8x32xf32>
    tpu.vector_store %arg4[%c0_29, %102, %c0_30, %c0_31], %105 {strides = array<i32>} : memref<1x8x8x32xf32, #tpu.memory_space<vmem>>, vector<1x1x8x32xf32>,
    %c2_i32 = arith.constant 2 : i32
    %c0_i32_32 = arith.constant 0 : i32
    %106 = arith.cmpi eq, %arg0, %c0_i32_32 : i32
    %c7_i32_33 = arith.constant 7 : i32
    %107 = arith.subi %c7_i32_33, %c2_i32 : i32
    %108 = arith.select %106, %c2_i32, %107 : i32
    %c0_34 = arith.constant 0 : index
    %109 = arith.index_cast %108 : i32 to index
    %c0_35 = arith.constant 0 : index
    %c0_36 = arith.constant 0 : index
    %110 = vector.load %arg2[%c0_34, %109, %c0_35, %c0_36] : memref<1x8x8x128xf32, #tpu.memory_space<vmem>>, vector<1x1x8x128xf32>
    %111 = vector.shape_cast %110 : vector<1x1x8x128xf32> to vector<8x128xf32>
    %112 = arith.truncf %94 : vector<8x32xf32> to vector<8x32xbf16>
    %c0_37 = arith.constant 0 : index
    %c0_38 = arith.constant 0 : index
    %c0_39 = arith.constant 0 : index
    %113 = vector.load %arg3[%c0_37, %c0_38, %c0_39] : memref<1x32x128xbf16, #tpu.memory_space<vmem>>, vector<1x32x128xbf16>
    %114 = vector.shape_cast %113 : vector<1x32x128xbf16> to vector<32x128xbf16>
    %cst_40 = arith.constant dense<0.000000e+00> : vector<8x128xf32>
    %115 = tpu.matmul %112, %114, %cst_40 {dimension_numbers = #tpu.dot_dimension_numbers<[1], [0], [0], [1], [0, 0, 1, 1], [], []>} : vector<8x32xbf16>, vector<32x128xbf16>, vector<8x128xf32> -> vector<8x128xf32>
    %116 = arith.addf %111, %115 : vector<8x128xf32>
    %117 = vector.extract_strided_slice %116 {offsets = [0, 0], sizes = [8, 32], strides = [1, 1]} : vector<8x128xf32> to vector<8x32xf32>
    %118 = arith.negf %117 : vector<8x32xf32>
    %119 = math.exp %118 : vector<8x32xf32>
    %cst_41 = arith.constant 1.000000e+00 : f32
    %120 = vector.broadcast %cst_41 : f32 to vector<8x32xf32>
    %121 = arith.addf %120, %119 : vector<8x32xf32>
    %122 = arith.divf %120, %121 : vector<8x32xf32>
    %123 = vector.extract_strided_slice %116 {offsets = [0, 32], sizes = [8, 32], strides = [1, 1]} : vector<8x128xf32> to vector<8x32xf32>
    %124 = arith.negf %123 : vector<8x32xf32>
    %125 = math.exp %124 : vector<8x32xf32>
    %cst_42 = arith.constant 1.000000e+00 : f32
    %126 = vector.broadcast %cst_42 : f32 to vector<8x32xf32>
    %127 = arith.addf %126, %125 : vector<8x32xf32>
    %128 = arith.divf %126, %127 : vector<8x32xf32>
    %129 = vector.extract_strided_slice %116 {offsets = [0, 64], sizes = [8, 32], strides = [1, 1]} : vector<8x128xf32> to vector<8x32xf32>
    %130 = math.tanh %129 : vector<8x32xf32>
    %131 = vector.extract_strided_slice %116 {offsets = [0, 96], sizes = [8, 32], strides = [1, 1]} : vector<8x128xf32> to vector<8x32xf32>
    %132 = arith.negf %131 : vector<8x32xf32>
    %133 = math.exp %132 : vector<8x32xf32>
    %cst_43 = arith.constant 1.000000e+00 : f32
    %134 = vector.broadcast %cst_43 : f32 to vector<8x32xf32>
    %135 = arith.addf %134, %133 : vector<8x32xf32>
    %136 = arith.divf %134, %135 : vector<8x32xf32>
    %137 = arith.mulf %128, %97 : vector<8x32xf32>
    %138 = arith.mulf %122, %130 : vector<8x32xf32>
    %139 = arith.addf %137, %138 : vector<8x32xf32>
    %140 = math.tanh %139 : vector<8x32xf32>
    %141 = arith.mulf %136, %140 : vector<8x32xf32>
    %142 = vector.broadcast %108 : i32 to vector<8x1xi32>
    %143 = arith.cmpi slt, %142, %0 : vector<8x1xi32>
    %144 = vector.shape_cast %143 : vector<8x1xi1> to vector<8x1xi1>
    %145 = vector.broadcast %144 : vector<8x1xi1> to vector<8x32xi1>
    %146 = arith.select %145, %141, %94 : vector<8x32xi1>, vector<8x32xf32>
    %147 = vector.shape_cast %143 : vector<8x1xi1> to vector<8x1xi1>
    %148 = vector.broadcast %147 : vector<8x1xi1> to vector<8x32xi1>
    %149 = arith.select %148, %139, %97 : vector<8x32xi1>, vector<8x32xf32>
    %cst_44 = arith.constant 0.000000e+00 : f32
    %150 = vector.broadcast %cst_44 : f32 to vector<8x32xf32>
    %151 = vector.shape_cast %143 : vector<8x1xi1> to vector<8x1xi1>
    %152 = vector.broadcast %151 : vector<8x1xi1> to vector<8x32xi1>
    %153 = arith.select %152, %141, %150 : vector<8x32xi1>, vector<8x32xf32>
    %c0_45 = arith.constant 0 : index
    %154 = arith.index_cast %108 : i32 to index
    %c0_46 = arith.constant 0 : index
    %c0_47 = arith.constant 0 : index
    %155 = vector.load %arg4[%c0_45, %154, %c0_46, %c0_47] : memref<1x8x8x32xf32, #tpu.memory_space<vmem>>, vector<1x1x8x32xf32>
    %156 = vector.shape_cast %155 : vector<1x1x8x32xf32> to vector<8x32xf32>
    %157 = vector.shape_cast %153 : vector<8x32xf32> to vector<1x1x8x32xf32>
    tpu.vector_store %arg4[%c0_45, %154, %c0_46, %c0_47], %157 {strides = array<i32>} : memref<1x8x8x32xf32, #tpu.memory_space<vmem>>, vector<1x1x8x32xf32>,
    %c3_i32 = arith.constant 3 : i32
    %c0_i32_48 = arith.constant 0 : i32
    %158 = arith.cmpi eq, %arg0, %c0_i32_48 : i32
    %c7_i32_49 = arith.constant 7 : i32
    %159 = arith.subi %c7_i32_49, %c3_i32 : i32
    %160 = arith.select %158, %c3_i32, %159 : i32
    %c0_50 = arith.constant 0 : index
    %161 = arith.index_cast %160 : i32 to index
    %c0_51 = arith.constant 0 : index
    %c0_52 = arith.constant 0 : index
    %162 = vector.load %arg2[%c0_50, %161, %c0_51, %c0_52] : memref<1x8x8x128xf32, #tpu.memory_space<vmem>>, vector<1x1x8x128xf32>
    %163 = vector.shape_cast %162 : vector<1x1x8x128xf32> to vector<8x128xf32>
    %164 = arith.truncf %146 : vector<8x32xf32> to vector<8x32xbf16>
    %c0_53 = arith.constant 0 : index
    %c0_54 = arith.constant 0 : index
    %c0_55 = arith.constant 0 : index
    %165 = vector.load %arg3[%c0_53, %c0_54, %c0_55] : memref<1x32x128xbf16, #tpu.memory_space<vmem>>, vector<1x32x128xbf16>
    %166 = vector.shape_cast %165 : vector<1x32x128xbf16> to vector<32x128xbf16>
    %cst_56 = arith.constant dense<0.000000e+00> : vector<8x128xf32>
    %167 = tpu.matmul %164, %166, %cst_56 {dimension_numbers = #tpu.dot_dimension_numbers<[1], [0], [0], [1], [0, 0, 1, 1], [], []>} : vector<8x32xbf16>, vector<32x128xbf16>, vector<8x128xf32> -> vector<8x128xf32>
    %168 = arith.addf %163, %167 : vector<8x128xf32>
    %169 = vector.extract_strided_slice %168 {offsets = [0, 0], sizes = [8, 32], strides = [1, 1]} : vector<8x128xf32> to vector<8x32xf32>
    %170 = arith.negf %169 : vector<8x32xf32>
    %171 = math.exp %170 : vector<8x32xf32>
    %cst_57 = arith.constant 1.000000e+00 : f32
    %172 = vector.broadcast %cst_57 : f32 to vector<8x32xf32>
    %173 = arith.addf %172, %171 : vector<8x32xf32>
    %174 = arith.divf %172, %173 : vector<8x32xf32>
    %175 = vector.extract_strided_slice %168 {offsets = [0, 32], sizes = [8, 32], strides = [1, 1]} : vector<8x128xf32> to vector<8x32xf32>
    %176 = arith.negf %175 : vector<8x32xf32>
    %177 = math.exp %176 : vector<8x32xf32>
    %cst_58 = arith.constant 1.000000e+00 : f32
    %178 = vector.broadcast %cst_58 : f32 to vector<8x32xf32>
    %179 = arith.addf %178, %177 : vector<8x32xf32>
    %180 = arith.divf %178, %179 : vector<8x32xf32>
    %181 = vector.extract_strided_slice %168 {offsets = [0, 64], sizes = [8, 32], strides = [1, 1]} : vector<8x128xf32> to vector<8x32xf32>
    %182 = math.tanh %181 : vector<8x32xf32>
    %183 = vector.extract_strided_slice %168 {offsets = [0, 96], sizes = [8, 32], strides = [1, 1]} : vector<8x128xf32> to vector<8x32xf32>
    %184 = arith.negf %183 : vector<8x32xf32>
    %185 = math.exp %184 : vector<8x32xf32>
    %cst_59 = arith.constant 1.000000e+00 : f32
    %186 = vector.broadcast %cst_59 : f32 to vector<8x32xf32>
    %187 = arith.addf %186, %185 : vector<8x32xf32>
    %188 = arith.divf %186, %187 : vector<8x32xf32>
    %189 = arith.mulf %180, %149 : vector<8x32xf32>
    %190 = arith.mulf %174, %182 : vector<8x32xf32>
    %191 = arith.addf %189, %190 : vector<8x32xf32>
    %192 = math.tanh %191 : vector<8x32xf32>
    %193 = arith.mulf %188, %192 : vector<8x32xf32>
    %194 = vector.broadcast %160 : i32 to vector<8x1xi32>
    %195 = arith.cmpi slt, %194, %0 : vector<8x1xi32>
    %196 = vector.shape_cast %195 : vector<8x1xi1> to vector<8x1xi1>
    %197 = vector.broadcast %196 : vector<8x1xi1> to vector<8x32xi1>
    %198 = arith.select %197, %193, %146 : vector<8x32xi1>, vector<8x32xf32>
    %199 = vector.shape_cast %195 : vector<8x1xi1> to vector<8x1xi1>
    %200 = vector.broadcast %199 : vector<8x1xi1> to vector<8x32xi1>
    %201 = arith.select %200, %191, %149 : vector<8x32xi1>, vector<8x32xf32>
    %cst_60 = arith.constant 0.000000e+00 : f32
    %202 = vector.broadcast %cst_60 : f32 to vector<8x32xf32>
    %203 = vector.shape_cast %195 : vector<8x1xi1> to vector<8x1xi1>
    %204 = vector.broadcast %203 : vector<8x1xi1> to vector<8x32xi1>
    %205 = arith.select %204, %193, %202 : vector<8x32xi1>, vector<8x32xf32>
    %c0_61 = arith.constant 0 : index
    %206 = arith.index_cast %160 : i32 to index
    %c0_62 = arith.constant 0 : index
    %c0_63 = arith.constant 0 : index
    %207 = vector.load %arg4[%c0_61, %206, %c0_62, %c0_63] : memref<1x8x8x32xf32, #tpu.memory_space<vmem>>, vector<1x1x8x32xf32>
    %208 = vector.shape_cast %207 : vector<1x1x8x32xf32> to vector<8x32xf32>
    %209 = vector.shape_cast %205 : vector<8x32xf32> to vector<1x1x8x32xf32>
    tpu.vector_store %arg4[%c0_61, %206, %c0_62, %c0_63], %209 {strides = array<i32>} : memref<1x8x8x32xf32, #tpu.memory_space<vmem>>, vector<1x1x8x32xf32>,
    %c4_i32 = arith.constant 4 : i32
    %c0_i32_64 = arith.constant 0 : i32
    %210 = arith.cmpi eq, %arg0, %c0_i32_64 : i32
    %c7_i32_65 = arith.constant 7 : i32
    %211 = arith.subi %c7_i32_65, %c4_i32 : i32
    %212 = arith.select %210, %c4_i32, %211 : i32
    %c0_66 = arith.constant 0 : index
    %213 = arith.index_cast %212 : i32 to index
    %c0_67 = arith.constant 0 : index
    %c0_68 = arith.constant 0 : index
    %214 = vector.load %arg2[%c0_66, %213, %c0_67, %c0_68] : memref<1x8x8x128xf32, #tpu.memory_space<vmem>>, vector<1x1x8x128xf32>
    %215 = vector.shape_cast %214 : vector<1x1x8x128xf32> to vector<8x128xf32>
    %216 = arith.truncf %198 : vector<8x32xf32> to vector<8x32xbf16>
    %c0_69 = arith.constant 0 : index
    %c0_70 = arith.constant 0 : index
    %c0_71 = arith.constant 0 : index
    %217 = vector.load %arg3[%c0_69, %c0_70, %c0_71] : memref<1x32x128xbf16, #tpu.memory_space<vmem>>, vector<1x32x128xbf16>
    %218 = vector.shape_cast %217 : vector<1x32x128xbf16> to vector<32x128xbf16>
    %cst_72 = arith.constant dense<0.000000e+00> : vector<8x128xf32>
    %219 = tpu.matmul %216, %218, %cst_72 {dimension_numbers = #tpu.dot_dimension_numbers<[1], [0], [0], [1], [0, 0, 1, 1], [], []>} : vector<8x32xbf16>, vector<32x128xbf16>, vector<8x128xf32> -> vector<8x128xf32>
    %220 = arith.addf %215, %219 : vector<8x128xf32>
    %221 = vector.extract_strided_slice %220 {offsets = [0, 0], sizes = [8, 32], strides = [1, 1]} : vector<8x128xf32> to vector<8x32xf32>
    %222 = arith.negf %221 : vector<8x32xf32>
    %223 = math.exp %222 : vector<8x32xf32>
    %cst_73 = arith.constant 1.000000e+00 : f32
    %224 = vector.broadcast %cst_73 : f32 to vector<8x32xf32>
    %225 = arith.addf %224, %223 : vector<8x32xf32>
    %226 = arith.divf %224, %225 : vector<8x32xf32>
    %227 = vector.extract_strided_slice %220 {offsets = [0, 32], sizes = [8, 32], strides = [1, 1]} : vector<8x128xf32> to vector<8x32xf32>
    %228 = arith.negf %227 : vector<8x32xf32>
    %229 = math.exp %228 : vector<8x32xf32>
    %cst_74 = arith.constant 1.000000e+00 : f32
    %230 = vector.broadcast %cst_74 : f32 to vector<8x32xf32>
    %231 = arith.addf %230, %229 : vector<8x32xf32>
    %232 = arith.divf %230, %231 : vector<8x32xf32>
    %233 = vector.extract_strided_slice %220 {offsets = [0, 64], sizes = [8, 32], strides = [1, 1]} : vector<8x128xf32> to vector<8x32xf32>
    %234 = math.tanh %233 : vector<8x32xf32>
    %235 = vector.extract_strided_slice %220 {offsets = [0, 96], sizes = [8, 32], strides = [1, 1]} : vector<8x128xf32> to vector<8x32xf32>
    %236 = arith.negf %235 : vector<8x32xf32>
    %237 = math.exp %236 : vector<8x32xf32>
    %cst_75 = arith.constant 1.000000e+00 : f32
    %238 = vector.broadcast %cst_75 : f32 to vector<8x32xf32>
    %239 = arith.addf %238, %237 : vector<8x32xf32>
    %240 = arith.divf %238, %239 : vector<8x32xf32>
    %241 = arith.mulf %232, %201 : vector<8x32xf32>
    %242 = arith.mulf %226, %234 : vector<8x32xf32>
    %243 = arith.addf %241, %242 : vector<8x32xf32>
    %244 = math.tanh %243 : vector<8x32xf32>
    %245 = arith.mulf %240, %244 : vector<8x32xf32>
    %246 = vector.broadcast %212 : i32 to vector<8x1xi32>
    %247 = arith.cmpi slt, %246, %0 : vector<8x1xi32>
    %248 = vector.shape_cast %247 : vector<8x1xi1> to vector<8x1xi1>
    %249 = vector.broadcast %248 : vector<8x1xi1> to vector<8x32xi1>
    %250 = arith.select %249, %245, %198 : vector<8x32xi1>, vector<8x32xf32>
    %251 = vector.shape_cast %247 : vector<8x1xi1> to vector<8x1xi1>
    %252 = vector.broadcast %251 : vector<8x1xi1> to vector<8x32xi1>
    %253 = arith.select %252, %243, %201 : vector<8x32xi1>, vector<8x32xf32>
    %cst_76 = arith.constant 0.000000e+00 : f32
    %254 = vector.broadcast %cst_76 : f32 to vector<8x32xf32>
    %255 = vector.shape_cast %247 : vector<8x1xi1> to vector<8x1xi1>
    %256 = vector.broadcast %255 : vector<8x1xi1> to vector<8x32xi1>
    %257 = arith.select %256, %245, %254 : vector<8x32xi1>, vector<8x32xf32>
    %c0_77 = arith.constant 0 : index
    %258 = arith.index_cast %212 : i32 to index
    %c0_78 = arith.constant 0 : index
    %c0_79 = arith.constant 0 : index
    %259 = vector.load %arg4[%c0_77, %258, %c0_78, %c0_79] : memref<1x8x8x32xf32, #tpu.memory_space<vmem>>, vector<1x1x8x32xf32>
    %260 = vector.shape_cast %259 : vector<1x1x8x32xf32> to vector<8x32xf32>
    %261 = vector.shape_cast %257 : vector<8x32xf32> to vector<1x1x8x32xf32>
    tpu.vector_store %arg4[%c0_77, %258, %c0_78, %c0_79], %261 {strides = array<i32>} : memref<1x8x8x32xf32, #tpu.memory_space<vmem>>, vector<1x1x8x32xf32>,
    %c5_i32 = arith.constant 5 : i32
    %c0_i32_80 = arith.constant 0 : i32
    %262 = arith.cmpi eq, %arg0, %c0_i32_80 : i32
    %c7_i32_81 = arith.constant 7 : i32
    %263 = arith.subi %c7_i32_81, %c5_i32 : i32
    %264 = arith.select %262, %c5_i32, %263 : i32
    %c0_82 = arith.constant 0 : index
    %265 = arith.index_cast %264 : i32 to index
    %c0_83 = arith.constant 0 : index
    %c0_84 = arith.constant 0 : index
    %266 = vector.load %arg2[%c0_82, %265, %c0_83, %c0_84] : memref<1x8x8x128xf32, #tpu.memory_space<vmem>>, vector<1x1x8x128xf32>
    %267 = vector.shape_cast %266 : vector<1x1x8x128xf32> to vector<8x128xf32>
    %268 = arith.truncf %250 : vector<8x32xf32> to vector<8x32xbf16>
    %c0_85 = arith.constant 0 : index
    %c0_86 = arith.constant 0 : index
    %c0_87 = arith.constant 0 : index
    %269 = vector.load %arg3[%c0_85, %c0_86, %c0_87] : memref<1x32x128xbf16, #tpu.memory_space<vmem>>, vector<1x32x128xbf16>
    %270 = vector.shape_cast %269 : vector<1x32x128xbf16> to vector<32x128xbf16>
    %cst_88 = arith.constant dense<0.000000e+00> : vector<8x128xf32>
    %271 = tpu.matmul %268, %270, %cst_88 {dimension_numbers = #tpu.dot_dimension_numbers<[1], [0], [0], [1], [0, 0, 1, 1], [], []>} : vector<8x32xbf16>, vector<32x128xbf16>, vector<8x128xf32> -> vector<8x128xf32>
    %272 = arith.addf %267, %271 : vector<8x128xf32>
    %273 = vector.extract_strided_slice %272 {offsets = [0, 0], sizes = [8, 32], strides = [1, 1]} : vector<8x128xf32> to vector<8x32xf32>
    %274 = arith.negf %273 : vector<8x32xf32>
    %275 = math.exp %274 : vector<8x32xf32>
    %cst_89 = arith.constant 1.000000e+00 : f32
    %276 = vector.broadcast %cst_89 : f32 to vector<8x32xf32>
    %277 = arith.addf %276, %275 : vector<8x32xf32>
    %278 = arith.divf %276, %277 : vector<8x32xf32>
    %279 = vector.extract_strided_slice %272 {offsets = [0, 32], sizes = [8, 32], strides = [1, 1]} : vector<8x128xf32> to vector<8x32xf32>
    %280 = arith.negf %279 : vector<8x32xf32>
    %281 = math.exp %280 : vector<8x32xf32>
    %cst_90 = arith.constant 1.000000e+00 : f32
    %282 = vector.broadcast %cst_90 : f32 to vector<8x32xf32>
    %283 = arith.addf %282, %281 : vector<8x32xf32>
    %284 = arith.divf %282, %283 : vector<8x32xf32>
    %285 = vector.extract_strided_slice %272 {offsets = [0, 64], sizes = [8, 32], strides = [1, 1]} : vector<8x128xf32> to vector<8x32xf32>
    %286 = math.tanh %285 : vector<8x32xf32>
    %287 = vector.extract_strided_slice %272 {offsets = [0, 96], sizes = [8, 32], strides = [1, 1]} : vector<8x128xf32> to vector<8x32xf32>
    %288 = arith.negf %287 : vector<8x32xf32>
    %289 = math.exp %288 : vector<8x32xf32>
    %cst_91 = arith.constant 1.000000e+00 : f32
    %290 = vector.broadcast %cst_91 : f32 to vector<8x32xf32>
    %291 = arith.addf %290, %289 : vector<8x32xf32>
    %292 = arith.divf %290, %291 : vector<8x32xf32>
    %293 = arith.mulf %284, %253 : vector<8x32xf32>
    %294 = arith.mulf %278, %286 : vector<8x32xf32>
    %295 = arith.addf %293, %294 : vector<8x32xf32>
    %296 = math.tanh %295 : vector<8x32xf32>
    %297 = arith.mulf %292, %296 : vector<8x32xf32>
    %298 = vector.broadcast %264 : i32 to vector<8x1xi32>
    %299 = arith.cmpi slt, %298, %0 : vector<8x1xi32>
    %300 = vector.shape_cast %299 : vector<8x1xi1> to vector<8x1xi1>
    %301 = vector.broadcast %300 : vector<8x1xi1> to vector<8x32xi1>
    %302 = arith.select %301, %297, %250 : vector<8x32xi1>, vector<8x32xf32>
    %303 = vector.shape_cast %299 : vector<8x1xi1> to vector<8x1xi1>
    %304 = vector.broadcast %303 : vector<8x1xi1> to vector<8x32xi1>
    %305 = arith.select %304, %295, %253 : vector<8x32xi1>, vector<8x32xf32>
    %cst_92 = arith.constant 0.000000e+00 : f32
    %306 = vector.broadcast %cst_92 : f32 to vector<8x32xf32>
    %307 = vector.shape_cast %299 : vector<8x1xi1> to vector<8x1xi1>
    %308 = vector.broadcast %307 : vector<8x1xi1> to vector<8x32xi1>
    %309 = arith.select %308, %297, %306 : vector<8x32xi1>, vector<8x32xf32>
    %c0_93 = arith.constant 0 : index
    %310 = arith.index_cast %264 : i32 to index
    %c0_94 = arith.constant 0 : index
    %c0_95 = arith.constant 0 : index
    %311 = vector.load %arg4[%c0_93, %310, %c0_94, %c0_95] : memref<1x8x8x32xf32, #tpu.memory_space<vmem>>, vector<1x1x8x32xf32>
    %312 = vector.shape_cast %311 : vector<1x1x8x32xf32> to vector<8x32xf32>
    %313 = vector.shape_cast %309 : vector<8x32xf32> to vector<1x1x8x32xf32>
    tpu.vector_store %arg4[%c0_93, %310, %c0_94, %c0_95], %313 {strides = array<i32>} : memref<1x8x8x32xf32, #tpu.memory_space<vmem>>, vector<1x1x8x32xf32>,
    %c6_i32 = arith.constant 6 : i32
    %c0_i32_96 = arith.constant 0 : i32
    %314 = arith.cmpi eq, %arg0, %c0_i32_96 : i32
    %c7_i32_97 = arith.constant 7 : i32
    %315 = arith.subi %c7_i32_97, %c6_i32 : i32
    %316 = arith.select %314, %c6_i32, %315 : i32
    %c0_98 = arith.constant 0 : index
    %317 = arith.index_cast %316 : i32 to index
    %c0_99 = arith.constant 0 : index
    %c0_100 = arith.constant 0 : index
    %318 = vector.load %arg2[%c0_98, %317, %c0_99, %c0_100] : memref<1x8x8x128xf32, #tpu.memory_space<vmem>>, vector<1x1x8x128xf32>
    %319 = vector.shape_cast %318 : vector<1x1x8x128xf32> to vector<8x128xf32>
    %320 = arith.truncf %302 : vector<8x32xf32> to vector<8x32xbf16>
    %c0_101 = arith.constant 0 : index
    %c0_102 = arith.constant 0 : index
    %c0_103 = arith.constant 0 : index
    %321 = vector.load %arg3[%c0_101, %c0_102, %c0_103] : memref<1x32x128xbf16, #tpu.memory_space<vmem>>, vector<1x32x128xbf16>
    %322 = vector.shape_cast %321 : vector<1x32x128xbf16> to vector<32x128xbf16>
    %cst_104 = arith.constant dense<0.000000e+00> : vector<8x128xf32>
    %323 = tpu.matmul %320, %322, %cst_104 {dimension_numbers = #tpu.dot_dimension_numbers<[1], [0], [0], [1], [0, 0, 1, 1], [], []>} : vector<8x32xbf16>, vector<32x128xbf16>, vector<8x128xf32> -> vector<8x128xf32>
    %324 = arith.addf %319, %323 : vector<8x128xf32>
    %325 = vector.extract_strided_slice %324 {offsets = [0, 0], sizes = [8, 32], strides = [1, 1]} : vector<8x128xf32> to vector<8x32xf32>
    %326 = arith.negf %325 : vector<8x32xf32>
    %327 = math.exp %326 : vector<8x32xf32>
    %cst_105 = arith.constant 1.000000e+00 : f32
    %328 = vector.broadcast %cst_105 : f32 to vector<8x32xf32>
    %329 = arith.addf %328, %327 : vector<8x32xf32>
    %330 = arith.divf %328, %329 : vector<8x32xf32>
    %331 = vector.extract_strided_slice %324 {offsets = [0, 32], sizes = [8, 32], strides = [1, 1]} : vector<8x128xf32> to vector<8x32xf32>
    %332 = arith.negf %331 : vector<8x32xf32>
    %333 = math.exp %332 : vector<8x32xf32>
    %cst_106 = arith.constant 1.000000e+00 : f32
    %334 = vector.broadcast %cst_106 : f32 to vector<8x32xf32>
    %335 = arith.addf %334, %333 : vector<8x32xf32>
    %336 = arith.divf %334, %335 : vector<8x32xf32>
    %337 = vector.extract_strided_slice %324 {offsets = [0, 64], sizes = [8, 32], strides = [1, 1]} : vector<8x128xf32> to vector<8x32xf32>
    %338 = math.tanh %337 : vector<8x32xf32>
    %339 = vector.extract_strided_slice %324 {offsets = [0, 96], sizes = [8, 32], strides = [1, 1]} : vector<8x128xf32> to vector<8x32xf32>
    %340 = arith.negf %339 : vector<8x32xf32>
    %341 = math.exp %340 : vector<8x32xf32>
    %cst_107 = arith.constant 1.000000e+00 : f32
    %342 = vector.broadcast %cst_107 : f32 to vector<8x32xf32>
    %343 = arith.addf %342, %341 : vector<8x32xf32>
    %344 = arith.divf %342, %343 : vector<8x32xf32>
    %345 = arith.mulf %336, %305 : vector<8x32xf32>
    %346 = arith.mulf %330, %338 : vector<8x32xf32>
    %347 = arith.addf %345, %346 : vector<8x32xf32>
    %348 = math.tanh %347 : vector<8x32xf32>
    %349 = arith.mulf %344, %348 : vector<8x32xf32>
    %350 = vector.broadcast %316 : i32 to vector<8x1xi32>
    %351 = arith.cmpi slt, %350, %0 : vector<8x1xi32>
    %352 = vector.shape_cast %351 : vector<8x1xi1> to vector<8x1xi1>
    %353 = vector.broadcast %352 : vector<8x1xi1> to vector<8x32xi1>
    %354 = arith.select %353, %349, %302 : vector<8x32xi1>, vector<8x32xf32>
    %355 = vector.shape_cast %351 : vector<8x1xi1> to vector<8x1xi1>
    %356 = vector.broadcast %355 : vector<8x1xi1> to vector<8x32xi1>
    %357 = arith.select %356, %347, %305 : vector<8x32xi1>, vector<8x32xf32>
    %cst_108 = arith.constant 0.000000e+00 : f32
    %358 = vector.broadcast %cst_108 : f32 to vector<8x32xf32>
    %359 = vector.shape_cast %351 : vector<8x1xi1> to vector<8x1xi1>
    %360 = vector.broadcast %359 : vector<8x1xi1> to vector<8x32xi1>
    %361 = arith.select %360, %349, %358 : vector<8x32xi1>, vector<8x32xf32>
    %c0_109 = arith.constant 0 : index
    %362 = arith.index_cast %316 : i32 to index
    %c0_110 = arith.constant 0 : index
    %c0_111 = arith.constant 0 : index
    %363 = vector.load %arg4[%c0_109, %362, %c0_110, %c0_111] : memref<1x8x8x32xf32, #tpu.memory_space<vmem>>, vector<1x1x8x32xf32>
    %364 = vector.shape_cast %363 : vector<1x1x8x32xf32> to vector<8x32xf32>
    %365 = vector.shape_cast %361 : vector<8x32xf32> to vector<1x1x8x32xf32>
    tpu.vector_store %arg4[%c0_109, %362, %c0_110, %c0_111], %365 {strides = array<i32>} : memref<1x8x8x32xf32, #tpu.memory_space<vmem>>, vector<1x1x8x32xf32>,
    %c7_i32_112 = arith.constant 7 : i32
    %c0_i32_113 = arith.constant 0 : i32
    %366 = arith.cmpi eq, %arg0, %c0_i32_113 : i32
    %c7_i32_114 = arith.constant 7 : i32
    %367 = arith.subi %c7_i32_114, %c7_i32_112 : i32
    %368 = arith.select %366, %c7_i32_112, %367 : i32
    %c0_115 = arith.constant 0 : index
    %369 = arith.index_cast %368 : i32 to index
    %c0_116 = arith.constant 0 : index
    %c0_117 = arith.constant 0 : index
    %370 = vector.load %arg2[%c0_115, %369, %c0_116, %c0_117] : memref<1x8x8x128xf32, #tpu.memory_space<vmem>>, vector<1x1x8x128xf32>
    %371 = vector.shape_cast %370 : vector<1x1x8x128xf32> to vector<8x128xf32>
    %372 = arith.truncf %354 : vector<8x32xf32> to vector<8x32xbf16>
    %c0_118 = arith.constant 0 : index
    %c0_119 = arith.constant 0 : index
    %c0_120 = arith.constant 0 : index
    %373 = vector.load %arg3[%c0_118, %c0_119, %c0_120] : memref<1x32x128xbf16, #tpu.memory_space<vmem>>, vector<1x32x128xbf16>
    %374 = vector.shape_cast %373 : vector<1x32x128xbf16> to vector<32x128xbf16>
    %cst_121 = arith.constant dense<0.000000e+00> : vector<8x128xf32>
    %375 = tpu.matmul %372, %374, %cst_121 {dimension_numbers = #tpu.dot_dimension_numbers<[1], [0], [0], [1], [0, 0, 1, 1], [], []>} : vector<8x32xbf16>, vector<32x128xbf16>, vector<8x128xf32> -> vector<8x128xf32>
    %376 = arith.addf %371, %375 : vector<8x128xf32>
    %377 = vector.extract_strided_slice %376 {offsets = [0, 0], sizes = [8, 32], strides = [1, 1]} : vector<8x128xf32> to vector<8x32xf32>
    %378 = arith.negf %377 : vector<8x32xf32>
    %379 = math.exp %378 : vector<8x32xf32>
    %cst_122 = arith.constant 1.000000e+00 : f32
    %380 = vector.broadcast %cst_122 : f32 to vector<8x32xf32>
    %381 = arith.addf %380, %379 : vector<8x32xf32>
    %382 = arith.divf %380, %381 : vector<8x32xf32>
    %383 = vector.extract_strided_slice %376 {offsets = [0, 32], sizes = [8, 32], strides = [1, 1]} : vector<8x128xf32> to vector<8x32xf32>
    %384 = arith.negf %383 : vector<8x32xf32>
    %385 = math.exp %384 : vector<8x32xf32>
    %cst_123 = arith.constant 1.000000e+00 : f32
    %386 = vector.broadcast %cst_123 : f32 to vector<8x32xf32>
    %387 = arith.addf %386, %385 : vector<8x32xf32>
    %388 = arith.divf %386, %387 : vector<8x32xf32>
    %389 = vector.extract_strided_slice %376 {offsets = [0, 64], sizes = [8, 32], strides = [1, 1]} : vector<8x128xf32> to vector<8x32xf32>
    %390 = math.tanh %389 : vector<8x32xf32>
    %391 = vector.extract_strided_slice %376 {offsets = [0, 96], sizes = [8, 32], strides = [1, 1]} : vector<8x128xf32> to vector<8x32xf32>
    %392 = arith.negf %391 : vector<8x32xf32>
    %393 = math.exp %392 : vector<8x32xf32>
    %cst_124 = arith.constant 1.000000e+00 : f32
    %394 = vector.broadcast %cst_124 : f32 to vector<8x32xf32>
    %395 = arith.addf %394, %393 : vector<8x32xf32>
    %396 = arith.divf %394, %395 : vector<8x32xf32>
    %397 = arith.mulf %388, %357 : vector<8x32xf32>
    %398 = arith.mulf %382, %390 : vector<8x32xf32>
    %399 = arith.addf %397, %398 : vector<8x32xf32>
    %400 = math.tanh %399 : vector<8x32xf32>
    %401 = arith.mulf %396, %400 : vector<8x32xf32>
    %402 = vector.broadcast %368 : i32 to vector<8x1xi32>
    %403 = arith.cmpi slt, %402, %0 : vector<8x1xi32>
    %404 = vector.shape_cast %403 : vector<8x1xi1> to vector<8x1xi1>
    %405 = vector.broadcast %404 : vector<8x1xi1> to vector<8x32xi1>
    %406 = arith.select %405, %401, %354 : vector<8x32xi1>, vector<8x32xf32>
    %407 = vector.shape_cast %403 : vector<8x1xi1> to vector<8x1xi1>
    %408 = vector.broadcast %407 : vector<8x1xi1> to vector<8x32xi1>
    %409 = arith.select %408, %399, %357 : vector<8x32xi1>, vector<8x32xf32>
    %cst_125 = arith.constant 0.000000e+00 : f32
    %410 = vector.broadcast %cst_125 : f32 to vector<8x32xf32>
    %411 = vector.shape_cast %403 : vector<8x1xi1> to vector<8x1xi1>
    %412 = vector.broadcast %411 : vector<8x1xi1> to vector<8x32xi1>
    %413 = arith.select %412, %401, %410 : vector<8x32xi1>, vector<8x32xf32>
    %c0_126 = arith.constant 0 : index
    %414 = arith.index_cast %368 : i32 to index
    %c0_127 = arith.constant 0 : index
    %c0_128 = arith.constant 0 : index
    %415 = vector.load %arg4[%c0_126, %414, %c0_127, %c0_128] : memref<1x8x8x32xf32, #tpu.memory_space<vmem>>, vector<1x1x8x32xf32>
    %416 = vector.shape_cast %415 : vector<1x1x8x32xf32> to vector<8x32xf32>
    %417 = vector.shape_cast %413 : vector<8x32xf32> to vector<1x1x8x32xf32>
    tpu.vector_store %arg4[%c0_126, %414, %c0_127, %c0_128], %417 {strides = array<i32>} : memref<1x8x8x32xf32, #tpu.memory_space<vmem>>, vector<1x1x8x32xf32>,
    %c8_i32 = arith.constant 8 : i32
    %c0_129 = arith.constant 0 : index
    %c0_130 = arith.constant 0 : index
    %c0_131 = arith.constant 0 : index
    %418 = vector.load %arg5[%c0_129, %c0_130, %c0_131] : memref<1x8x32xf32, #tpu.memory_space<vmem>>, vector<1x8x32xf32>
    %419 = vector.shape_cast %418 : vector<1x8x32xf32> to vector<8x32xf32>
    %420 = vector.shape_cast %406 : vector<8x32xf32> to vector<1x8x32xf32>
    tpu.vector_store %arg5[%c0_129, %c0_130, %c0_131], %420 {strides = array<i32>} : memref<1x8x32xf32, #tpu.memory_space<vmem>>, vector<1x8x32xf32>,
    return
  }
  func.func @transform_0(%arg0: i32) -> (i32, i32) {
    %c0_i32 = arith.constant 0 : i32
    %c0_i32_0 = arith.constant 0 : i32
    %c0_i32_1 = arith.constant 0 : i32
    return %c0_i32, %c0_i32_0 : i32, i32
  }
  func.func @transform_1(%arg0: i32) -> (i32, i32, i32, i32) {
    %c0_i32 = arith.constant 0 : i32
    %c0_i32_0 = arith.constant 0 : i32
    %c0_i32_1 = arith.constant 0 : i32
    %c0_i32_2 = arith.constant 0 : i32
    return %arg0, %c0_i32, %c0_i32_0, %c0_i32_1 : i32, i32, i32, i32
  }
  func.func @transform_2(%arg0: i32) -> (i32, i32, i32) {
    %c0_i32 = arith.constant 0 : i32
    %c0_i32_0 = arith.constant 0 : i32
    %c0_i32_1 = arith.constant 0 : i32
    return %arg0, %c0_i32, %c0_i32_0 : i32, i32, i32
  }
  func.func @transform_3(%arg0: i32) -> (i32, i32, i32, i32) {
    %c0_i32 = arith.constant 0 : i32
    %c0_i32_0 = arith.constant 0 : i32
    %c0_i32_1 = arith.constant 0 : i32
    %c0_i32_2 = arith.constant 0 : i32
    return %arg0, %c0_i32, %c0_i32_0, %c0_i32_1 : i32, i32, i32, i32
  }
  func.func @transform_4(%arg0: i32) -> (i32, i32, i32) {
    %c0_i32 = arith.constant 0 : i32
    %c0_i32_0 = arith.constant 0 : i32
    %c0_i32_1 = arith.constant 0 : i32
    return %arg0, %c0_i32, %c0_i32_0 : i32, i32, i32
  }
}

</mosaic_0001>

<llo_original>
// kernel: tpu_custom_call.1
$region0: #{tpu_custom_call.1}
  #allocation0 [shape = 'u32[]', space=smem, size = 0x4, offset = 0x4, fixed_abs, tag = 'smem constant byte address 0x4 - core index']
  #allocation1 [shape = 'u32[144,128]{1,0:T(1,128)}', space=vmem, size = 0x12000, scoped, tag = 'internal scratch']
  %s0 = inlined_call_operand.vmem [shape: s32[8,1], index: 0, kind: input, shape index: {}]
  %s1 = inlined_call_operand.hbm [shape: f32[2,8,8,128], index: 1, kind: input, shape index: {}]
  %s2 = inlined_call_operand.hbm [shape: bf16[2,32,128], index: 2, kind: input, shape index: {}]
  %s3 = inlined_call_operand.hbm [shape: f32[2,8,8,32], index: 3, kind: output, shape index: {0}]
  %s4 = inlined_call_operand.hbm [shape: f32[2,8,32], index: 4, kind: output, shape index: {1}]
  %5 = xla_tuple %s3, %s4
  %s6 = sld [smem:[#allocation0]]
  $region61: #{tpu_custom_call.1} parent=0
    _
  %s8 = ssub.s32 1, %s6
  %s9 = scalar_select 0, %s8, %s6
  $region1: #{tpu_custom_call.1} parent=0
    #allocation2 [shape = 'u8[65536]{0}', space=vmem, size = 0x10000, scoped, tag = 'input window, operand 1']
    #allocation3 [shape = 's32[2]{0}', space=sflag, size = 0x8, scoped, tag = 'scoped memory for tpu_custom_call.1']
    #allocation4 [shape = 's32[2]{0}', space=sflag, size = 0x8, scoped, tag = 'scoped memory for tpu_custom_call.1']
    #allocation5 [shape = 'u8[16384]{0}', space=vmem, size = 0x4000, scoped, tag = 'input window, operand 2']
    #allocation6 [shape = 's32[2]{0}', space=sflag, size = 0x8, scoped, tag = 'scoped memory for tpu_custom_call.1']
    #allocation7 [shape = 'u8[65536]{0}', space=vmem, size = 0x10000, scoped, tag = 'output window, operand 0']
    #allocation8 [shape = 'u8[8192]{0}', space=vmem, size = 0x2000, scoped, tag = 'output window, operand 1']
    #allocation9 [shape = 's32[2]{0}', space=sflag, size = 0x8, scoped, tag = 'scoped memory for tpu_custom_call.1']
    %10 = vsyncpa [#allocation3], 0
    %s11 = scalar_lea.sflag [#allocation3], 1
    %12 = vsyncpa %s11, 0
    %13 = vsyncpa [#allocation6], 0
    %s14 = scalar_lea.sflag [#allocation6], 1
    %15 = vsyncpa %s14, 0
    %16 = vsyncpa [#allocation4], 0
    %s17 = scalar_lea.sflag [#allocation4], 1
    %18 = vsyncpa %s17, 0
    %19 = vsyncpa [#allocation9], 0
    %s20 = scalar_lea.sflag [#allocation9], 1
    %21 = vsyncpa %s20, 0
    loop: start=0, step=1, limit=4
    $region2: #{tpu_custom_call.1} parent=1 // loop_pre_header
      _
    $region3: #{tpu_custom_call.1} parent=1 // loop_header
      %s23 = sphi 0, %s27
      %p24 = scmp.ge.s32.totalorder %s23, 4
      %s31 = sphi 0, %s31
      %s33 = sphi 0, %s31
      %s34 = sphi 0, %s33
      %s48 = sphi 0, %s34
      %s54 = sphi 0, %s56
      %s57 = sphi 0, %s54
      %s58 = sphi 0, %s57
      %s74 = sphi 0, %s58
      %s80 = sphi 0, %s82
      %s83 = sphi 0, %s80
      %s84 = sphi 0, %s83
      %s100 = sphi 0, %s84
      %s106 = sphi 0, %s108
      %s109 = sphi 0, %s106
      %s110 = sphi 0, %s109
      %s126 = sphi 0, %s110
      %s132 = sphi 0, %s134
      %s135 = sphi 0, %s132
      %s136 = sphi 0, %s135
      %s152 = sphi 0, %s136
    $region4: #{tpu_custom_call.1} parent=1 // loop_header_branch
      %26 = sbr.rel (%p24) target = $region8
    $region5: #{tpu_custom_call.1} parent=1 // loop_body
      %s28 = ssub.s32 %s23, 1
      %s29 = ssub.s32 %s23, 2
      %s30 = sadd.s32 %s23, 1
      %s32 = sadd.s32 %s31, 1
      %p35 = scmp.eq.s32.totalorder %s23, 1
      %p36 = scmp.ne.s32.totalorder %s31, %s33
      %p37 = scmp.eq.s32.totalorder %s23, 0
      %p38 = por %p36, %p37
      %p39 = scmp.ne.s32.totalorder %s31, %s33
      %p40 = scmp.eq.s32.totalorder %s28, 1
      %p41 = por %p39, %p40
      %p42 = scmp.ne.s32.totalorder %s33, %s34
      %p43 = scmp.eq.s32.totalorder %s28, 0
      %p44 = por %p42, %p43
      %p45 = scmp.ne.s32.totalorder %s33, %s34
      %p46 = scmp.eq.s32.totalorder %s29, 1
      %p47 = por %p45, %p46
      %p49 = scmp.ne.s32.totalorder %s34, %s48
      %p50 = scmp.eq.s32.totalorder %s29, 0
      %p51 = por %p49, %p50
      %s52 = ssub.s32 %s23, %s30
      %p53 = scmp.eq.s32.totalorder %s52, 0
      %s55 = sadd.s32 %s54, 1
      %s56 = scalar_select %p53, %s54, %s55
      %p59 = pneg %p53
      %p60 = scmp.eq.s32.totalorder %s23, 1
      %p61 = por %p59, %p60
      %p62 = scmp.ne.s32.totalorder %s54, %s57
      %p63 = scmp.eq.s32.totalorder %s23, 0
      %p64 = por %p62, %p63
      %p65 = scmp.ne.s32.totalorder %s54, %s57
      %p66 = scmp.eq.s32.totalorder %s28, 1
      %p67 = por %p65, %p66
      %p68 = scmp.ne.s32.totalorder %s57, %s58
      %p69 = scmp.eq.s32.totalorder %s28, 0
      %p70 = por %p68, %p69
      %p71 = scmp.ne.s32.totalorder %s57, %s58
      %p72 = scmp.eq.s32.totalorder %s29, 1
      %p73 = por %p71, %p72
      %p75 = scmp.ne.s32.totalorder %s58, %s74
      %p76 = scmp.eq.s32.totalorder %s29, 0
      %p77 = por %p75, %p76
      %s78 = ssub.s32 %s23, %s30
      %p79 = scmp.eq.s32.totalorder %s78, 0
      %s81 = sadd.s32 %s80, 1
      %s82 = scalar_select %p79, %s80, %s81
      %p85 = pneg %p79
      %p86 = scmp.eq.s32.totalorder %s23, 1
      %p87 = por %p85, %p86
      %p88 = scmp.ne.s32.totalorder %s80, %s83
      %p89 = scmp.eq.s32.totalorder %s23, 0
      %p90 = por %p88, %p89
      %p91 = scmp.ne.s32.totalorder %s80, %s83
      %p92 = scmp.eq.s32.totalorder %s28, 1
      %p93 = por %p91, %p92
      %p94 = scmp.ne.s32.totalorder %s83, %s84
      %p95 = scmp.eq.s32.totalorder %s28, 0
      %p96 = por %p94, %p95
      %p97 = scmp.ne.s32.totalorder %s83, %s84
      %p98 = scmp.eq.s32.totalorder %s29, 1
      %p99 = por %p97, %p98
      %p101 = scmp.ne.s32.totalorder %s84, %s100
      %p102 = scmp.eq.s32.totalorder %s29, 0
      %p103 = por %p101, %p102
      %s104 = ssub.s32 %s23, %s30
      %p105 = scmp.eq.s32.totalorder %s104, 0
      %s107 = sadd.s32 %s106, 1
      %s108 = scalar_select %p105, %s106, %s107
      %p111 = pneg %p105
      %p112 = scmp.eq.s32.totalorder %s23, 1
      %p113 = por %p111, %p112
      %p114 = scmp.ne.s32.totalorder %s106, %s109
      %p115 = scmp.eq.s32.totalorder %s23, 0
      %p116 = por %p114, %p115
      %p117 = scmp.ne.s32.totalorder %s106, %s109
      %p118 = scmp.eq.s32.totalorder %s28, 1
      %p119 = por %p117, %p118
      %p120 = scmp.ne.s32.totalorder %s109, %s110
      %p121 = scmp.eq.s32.totalorder %s28, 0
      %p122 = por %p120, %p121
      %p123 = scmp.ne.s32.totalorder %s109, %s110
      %p124 = scmp.eq.s32.totalorder %s29, 1
      %p125 = por %p123, %p124
      %p127 = scmp.ne.s32.totalorder %s110, %s126
      %p128 = scmp.eq.s32.totalorder %s29, 0
      %p129 = por %p127, %p128
      %s130 = ssub.s32 %s23, %s30
      %p131 = scmp.eq.s32.totalorder %s130, 0
      %s133 = sadd.s32 %s132, 1
      %s134 = scalar_select %p131, %s132, %s133
      %p137 = pneg %p131
      %p138 = scmp.eq.s32.totalorder %s23, 1
      %p139 = por %p137, %p138
      %p140 = scmp.ne.s32.totalorder %s132, %s135
      %p141 = scmp.eq.s32.totalorder %s23, 0
      %p142 = por %p140, %p141
      %p143 = scmp.ne.s32.totalorder %s132, %s135
      %p144 = scmp.eq.s32.totalorder %s28, 1
      %p145 = por %p143, %p144
      %p146 = scmp.ne.s32.totalorder %s135, %s136
      %p147 = scmp.eq.s32.totalorder %s28, 0
      %p148 = por %p146, %p147
      %p149 = scmp.ne.s32.totalorder %s135, %s136
      %p150 = scmp.eq.s32.totalorder %s29, 1
      %p151 = por %p149, %p150
      %p153 = scmp.ne.s32.totalorder %s136, %s152
      %p154 = scmp.eq.s32.totalorder %s29, 0
      %p155 = por %p153, %p154
      %p156 = scmp.le.s32.totalorder 1, %s23
      %p157 = scmp.lt.s32.totalorder %s23, 3
      %p158 = pnand %p156, %p157
      %p159 = pneg %p158
      // Predicated region
      $region9: #{tpu_custom_call.1} parent=5 // pred_check
        _
      $region10: #{tpu_custom_call.1} parent=5 // pred_check_branch
        %161 = sbr.rel (%p158) target = $region12
      $region11: #{tpu_custom_call.1} parent=5 // pred_region
        %s162 = ssub.s32 %s23, 1
        // Predicated region
        $region13: #{tpu_custom_call.1} parent=11 // pred_check
          %p163 = pneg %p44
        $region14: #{tpu_custom_call.1} parent=11 // pred_check_branch
          %165 = sbr.rel (%p163) target = $region16
        $region15: #{tpu_custom_call.1} parent=11 // pred_region
          _
        $region16: #{tpu_custom_call.1} parent=11 // pred_fallthru
          _
      $region12: #{tpu_custom_call.1} parent=5 // pred_fallthru
        _
      %p166 = scmp.lt.s32.totalorder %s23, 2
      // Predicated region
      $region17: #{tpu_custom_call.1} parent=5 // pred_check
        %p167 = pneg %p166
      $region18: #{tpu_custom_call.1} parent=5 // pred_check_branch
        %169 = sbr.rel (%p167) target = $region20
      $region19: #{tpu_custom_call.1} parent=5 // pred_region
        // Predicated region
        $region21: #{tpu_custom_call.1} parent=19 // pred_check
          %p170 = pneg %p64
        $region22: #{tpu_custom_call.1} parent=19 // pred_check_branch
          %172 = sbr.rel (%p170) target = $region24
        $region23: #{tpu_custom_call.1} parent=19 // pred_region
          %s173 = sand.u32 %s54, 1
          %s174 = scalar_lea.sflag [#allocation3], %s173
          %s175 = sand.u32 %s54, 1
          %s176 = smul.addr %s175, 64
          %s177 = scalar_lea.vmem [#allocation2], %s176
          %s179 = ssub.s32 1024, 1024
          %180 = vsyncadd %s174, %s179
          %s181 = smul.addr %s23, 8
          %s182 = smul.addr %s181, 128
          %s183 = scalar_lea.hbm %s1, %s182
          %s184 = sshll.u32 %s177, 4
          %s185 = int_to_ptr.vmem [resolvable:$true] %s184
          %190 = dma.hbm_to_vmem [thread:$0]  %s183, 1024, %s185, %s174, 128, 128, 8
        $region24: #{tpu_custom_call.1} parent=19 // pred_fallthru
          _
        // Predicated region
        $region25: #{tpu_custom_call.1} parent=19 // pred_check
          %p191 = pneg %p90
        $region26: #{tpu_custom_call.1} parent=19 // pred_check_branch
          %193 = sbr.rel (%p191) target = $region28
        $region27: #{tpu_custom_call.1} parent=19 // pred_region
          %s194 = sand.u32 %s80, 1
          %s195 = scalar_lea.sflag [#allocation6], %s194
          %s196 = sand.u32 %s80, 1
          %s197 = smul.addr %s196, 16
          %s198 = scalar_lea.vmem [#allocation5], %s197
          %s200 = ssub.s32 256, 256
          %201 = vsyncadd %s195, %s200
          %s202 = smul.addr %s23, 4
          %s203 = smul.addr %s202, 64
          %s204 = scalar_lea.hbm %s2, %s203
          %s205 = sshll.u32 %s198, 4
          %s206 = int_to_ptr.vmem [resolvable:$true] %s205
          %211 = dma.hbm_to_vmem [thread:$0]  %s204, 256, %s206, %s195, 64, 64, 4
        $region28: #{tpu_custom_call.1} parent=19 // pred_fallthru
          _
      $region20: #{tpu_custom_call.1} parent=5 // pred_fallthru
        _
      %p212 = scmp.le.s32.totalorder 1, %s23
      %p213 = scmp.lt.s32.totalorder %s23, 3
      %p214 = pnand %p212, %p213
      %p215 = pneg %p214
      // Predicated region
      $region29: #{tpu_custom_call.1} parent=5 // pred_check
        _
      $region30: #{tpu_custom_call.1} parent=5 // pred_check_branch
        %217 = sbr.rel (%p214) target = $region32
      $region31: #{tpu_custom_call.1} parent=5 // pred_region
        %s218 = ssub.s32 %s23, 1
        %s219 = sand.u32 %s57, 1
        %s220 = scalar_lea.sflag [#allocation3], %s219
        %s221 = sand.u32 %s57, 1
        %s222 = smul.addr %s221, 64
        %s223 = scalar_lea.vmem [#allocation2], %s222
        // Predicated region
        $region33: #{tpu_custom_call.1} parent=31 // pred_check
          %p224 = pneg %p70
        $region34: #{tpu_custom_call.1} parent=31 // pred_check_branch
          %226 = sbr.rel (%p224) target = $region36
        $region35: #{tpu_custom_call.1} parent=31 // pred_region
          %227 = dma.done %s220, 1024
        $region36: #{tpu_custom_call.1} parent=31 // pred_fallthru
          _
        %s228 = sand.u32 %s83, 1
        %s229 = scalar_lea.sflag [#allocation6], %s228
        %s230 = sand.u32 %s83, 1
        %s231 = smul.addr %s230, 16
        %s232 = scalar_lea.vmem [#allocation5], %s231
        // Predicated region
        $region37: #{tpu_custom_call.1} parent=31 // pred_check
          %p233 = pneg %p96
        $region38: #{tpu_custom_call.1} parent=31 // pred_check_branch
          %235 = sbr.rel (%p233) target = $region40
        $region39: #{tpu_custom_call.1} parent=31 // pred_region
          %236 = dma.done %s229, 256
        $region40: #{tpu_custom_call.1} parent=31 // pred_fallthru
          _
        %p237 = pneg %p44
        %p238 = pneg %p41
        %s239 = sand.u32 %s57, 1
        %s240 = scalar_lea.sflag [#allocation3], %s239
        %s241 = sand.u32 %s57, 1
        %s242 = smul.addr %s241, 64
        %s243 = scalar_lea.vmem [#allocation2], %s242
        %p244 = pneg %p70
        %p245 = pneg %p67
        %s246 = sand.u32 %s83, 1
        %s247 = scalar_lea.sflag [#allocation6], %s246
        %s248 = sand.u32 %s83, 1
        %s249 = smul.addr %s248, 16
        %s250 = scalar_lea.vmem [#allocation5], %s249
        %p251 = pneg %p96
        %p252 = pneg %p93
        %p253 = pneg %p122
        %p254 = pneg %p119
        %s255 = sand.u32 %s109, 1
        %s256 = scalar_lea.sflag [#allocation4], %s255
        %s257 = sand.u32 %s109, 1
        %s258 = smul.addr %s257, 64
        %s259 = scalar_lea.vmem [#allocation7], %s258
        %p260 = pneg %p148
        %p261 = pneg %p145
        %s262 = sand.u32 %s135, 1
        %s263 = scalar_lea.sflag [#allocation9], %s262
        %s264 = sand.u32 %s135, 1
        %s265 = smul.addr %s264, 8
        %s266 = scalar_lea.vmem [#allocation8], %s265
        %v268 = vld [vmem:[%s0] sm:$0xff]
        %p269 = scmp.eq.s32.totalorder %s28, 0
        %s270 = scalar_select %p269, 0, 7
        %s271 = smul.u32 %s270, 8
        %s272 = scalar_lea.vmem %s223, %s271 [#allocation2]
        %v273 = vld [vmem:[%s272] sm:$0xff]
        %v274 = vld [vmem:[%s232] sm:$0xf]
        %v275 = vld [vmem:[%s232 + $0x4] sm:$0xf]
        %v276 = vld [vmem:[%s232 + $0x8] sm:$0xf]
        %v277 = vld [vmem:[%s232 + $0xc] sm:$0xf]
        %v282 = vunpack.c.l.b16 %v274
        %v283 = vunpack.c.l.b16 %v275
        %v284 = vunpack.c.l.b16 %v276
        %v285 = vunpack.c.l.b16 %v277
        %v286 = vpack.c.b16 %v283, %v282
        %v287 = vpack.c.b16 %v285, %v284
        %vm290 = vcmask 261120
        %v292 = vsel %vm290, 0, 0
        %294 = vmatprep.subr.bf16.mxu0 0
        %295 = vmatpush1.bf16.msra.mxu0 %v286
        %296 = vmatprep.subr.bf16.mxu0 0
        %297 = vmatpush1.bf16.msra.mxu0 %v287
        %298 = vmatprep.subr.bf16.mxu0 0
        %299 = vmatpush1.bf16.msra.mxu0 0
        %300 = vmatprep.subr.bf16.mxu0 0
        %301 = vmatpush1.bf16.msra.mxu0 0
        %302 = vmatprep.subr.bf16.mxu0 0
        %303 = vmatpush1.bf16.msra.mxu0 0
        %304 = vmatprep.subr.bf16.mxu0 0
        %305 = vmatpush1.bf16.msra.mxu0 0
        %306 = vmatprep.subr.bf16.mxu0 0
        %307 = vmatpush1.bf16.msra.mxu0 0
        %308 = vmatprep.subr.bf16.mxu0 0
        %309 = vmatpush1.bf16.msra.mxu0 0
        %310 = vmatprep.subr.bf16.mxu0 0
        %311 = vmatpush1.bf16.msra.mxu0 0
        %312 = vmatprep.subr.bf16.mxu0 0
        %313 = vmatpush1.bf16.msra.mxu0 0
        %314 = vmatprep.subr.bf16.mxu0 0
        %315 = vmatpush1.bf16.msra.mxu0 0
        %316 = vmatprep.subr.bf16.mxu0 0
        %317 = vmatpush1.bf16.msra.mxu0 0
        %318 = vmatprep.subr.bf16.mxu0 0
        %319 = vmatpush1.bf16.msra.mxu0 0
        %320 = vmatprep.subr.bf16.mxu0 0
        %321 = vmatpush1.bf16.msra.mxu0 0
        %322 = vmatprep.subr.bf16.mxu0 0
        %323 = vmatpush1.bf16.msra.mxu0 0
        %324 = vmatprep.subr.bf16.mxu0 0
        %325 = vmatpush1.bf16.msra.mxu0 0
        %326 = vmatprep.mubr.bf16.mxu0 0
        %327 = vmatmul.mubr.bf16.gmra.mrb[0].mxu0 %v292
        %v328 = vpop.f32.mrb[0].mxu0
        %v329 = vadd.f32 0.0, %v328
        %v330 = vpop.f32.mrb[0].mxu0
        %v331 = vpop.f32.mrb[0].mxu0
        %v332 = vpop.f32.mrb[0].mxu0
        %333 = vdwg.mxu0
        %v334 = vadd.f32 %v273, %v329
        %v335 = vxor.u32 %v334, 2147483648
        %v336 = vmul.f32 %v335, 1.442695
        %v337 = vpow.pop %v336
        %v338 = vadd.f32 %v337, 1.0
        %v339 = vrcp.pop %v338
        %v340 = vmul.f32 1.0, %v339
        %v341 = vtanh.pop %v334
        %v342 = vmul.f32 %v340, 0.0
        %344 = vrot.lane.b32.xlu0 %v341, 64
        %v345 = vpop.permute.xlu0 %344
        %v347 = vmul.f32 %v340, %v345
        %349 = vrot.lane.b32.xlu0 %v347, 32
        %v350 = vpop.permute.xlu0 %349
        %v352 = vadd.f32 %v342, %v350
        %v353 = vtanh.pop %v352
        %355 = vrot.lane.b32.xlu0 %v353, 64
        %v356 = vpop.permute.xlu0 %355
        %v358 = vmul.f32 %v340, %v356
        %v359 = vstv %s270
        %vm360 = vcmp.lt.s32.totalorder %v359, %v268
        %v361 = vsel %vm360, 1, 0
        %362 = vset.pattern.permute.xlu0 0
        %363 = vperm.xlu0 %362, %v361
        %v364 = vpop.permute.xlu0 %363
        %vm365 = vcmp.eq.s32.totalorder %v364, 1
        %v366 = vsel %vm365, %v358, 0.0
        %v367 = vsel %vm365, %v352, 0.0
        %369 = vrot.lane.b32.xlu0 %v366, 32
        %v370 = vpop.permute.xlu0 %369
        %s372 = scalar_lea.vmem %s259, %s271 [#allocation7]
        %373 = vst.msk [vmem:[%s372] sm:$0xff] %vm290, %v370
        %s374 = scalar_select %p269, 1, 6
        %s375 = smul.u32 %s374, 8
        %s376 = scalar_lea.vmem %s223, %s375 [#allocation2]
        %v377 = vld [vmem:[%s376] sm:$0xff]
        %v378 = vpack.c.bf16 %v366, %v366
        %v379 = vld [vmem:[%s232] sm:$0xf]
        %v380 = vld [vmem:[%s232 + $0x4] sm:$0xf]
        %v381 = vld [vmem:[%s232 + $0x8] sm:$0xf]
        %v382 = vld [vmem:[%s232 + $0xc] sm:$0xf]
        %384 = vrot.lane.b32.xlu0 %v378, 32
        %v385 = vpop.permute.xlu0 %384
        %v390 = vunpack.c.l.b16 %v379
        %v391 = vunpack.c.l.b16 %v380
        %v392 = vunpack.c.l.b16 %v381
        %v393 = vunpack.c.l.b16 %v382
        %v394 = vpack.c.b16 %v391, %v390
        %v395 = vpack.c.b16 %v393, %v392
        %v399 = vsel %vm290, %v385, 0
        %401 = vmatprep.subr.bf16.mxu0 0
        %402 = vmatpush1.bf16.msra.mxu0 %v394
        %403 = vmatprep.subr.bf16.mxu0 0
        %404 = vmatpush1.bf16.msra.mxu0 %v395
        %405 = vmatprep.subr.bf16.mxu0 0
        %406 = vmatpush1.bf16.msra.mxu0 0
        %407 = vmatprep.subr.bf16.mxu0 0
        %408 = vmatpush1.bf16.msra.mxu0 0
        %409 = vmatprep.subr.bf16.mxu0 0
        %410 = vmatpush1.bf16.msra.mxu0 0
        %411 = vmatprep.subr.bf16.mxu0 0
        %412 = vmatpush1.bf16.msra.mxu0 0
        %413 = vmatprep.subr.bf16.mxu0 0
        %414 = vmatpush1.bf16.msra.mxu0 0
        %415 = vmatprep.subr.bf16.mxu0 0
        %416 = vmatpush1.bf16.msra.mxu0 0
        %417 = vmatprep.subr.bf16.mxu0 0
        %418 = vmatpush1.bf16.msra.mxu0 0
        %419 = vmatprep.subr.bf16.mxu0 0
        %420 = vmatpush1.bf16.msra.mxu0 0
        %421 = vmatprep.subr.bf16.mxu0 0
        %422 = vmatpush1.bf16.msra.mxu0 0
        %423 = vmatprep.subr.bf16.mxu0 0
        %424 = vmatpush1.bf16.msra.mxu0 0
        %425 = vmatprep.subr.bf16.mxu0 0
        %426 = vmatpush1.bf16.msra.mxu0 0
        %427 = vmatprep.subr.bf16.mxu0 0
        %428 = vmatpush1.bf16.msra.mxu0 0
        %429 = vmatprep.subr.bf16.mxu0 0
        %430 = vmatpush1.bf16.msra.mxu0 0
        %431 = vmatprep.subr.bf16.mxu0 0
        %432 = vmatpush1.bf16.msra.mxu0 0
        %433 = vmatprep.mubr.bf16.mxu0 0
        %434 = vmatmul.mubr.bf16.gmra.mrb[0].mxu0 %v399
        %v435 = vpop.f32.mrb[0].mxu0
        %v436 = vadd.f32 0.0, %v435
        %v437 = vpop.f32.mrb[0].mxu0
        %v438 = vpop.f32.mrb[0].mxu0
        %v439 = vpop.f32.mrb[0].mxu0
        %440 = vdwg.mxu0
        %v441 = vadd.f32 %v377, %v436
        %v442 = vxor.u32 %v441, 2147483648
        %v443 = vmul.f32 %v442, 1.442695
        %v444 = vpow.pop %v443
        %v445 = vadd.f32 %v444, 1.0
        %v446 = vrcp.pop %v445
        %v447 = vmul.f32 1.0, %v446
        %v448 = vtanh.pop %v441
        %v449 = vmul.f32 %v447, %v367
        %451 = vrot.lane.b32.xlu0 %v448, 64
        %v452 = vpop.permute.xlu0 %451
        %v454 = vmul.f32 %v447, %v452
        %456 = vrot.lane.b32.xlu0 %v454, 32
        %v457 = vpop.permute.xlu0 %456
        %v459 = vadd.f32 %v449, %v457
        %v460 = vtanh.pop %v459
        %462 = vrot.lane.b32.xlu0 %v460, 64
        %v463 = vpop.permute.xlu0 %462
        %v465 = vmul.f32 %v447, %v463
        %v466 = vstv %s374
        %vm467 = vcmp.lt.s32.totalorder %v466, %v268
        %v468 = vsel %vm467, 1, 0
        %469 = vset.pattern.permute.xlu0 0
        %470 = vperm.xlu0 %469, %v468
        %v471 = vpop.permute.xlu0 %470
        %vm472 = vcmp.eq.s32.totalorder %v471, 1
        %v473 = vsel %vm472, %v465, %v366
        %v474 = vsel %vm472, %v459, %v367
        %v475 = vsel %vm472, %v465, 0.0
        %477 = vrot.lane.b32.xlu0 %v475, 32
        %v478 = vpop.permute.xlu0 %477
        %s480 = scalar_lea.vmem %s259, %s375 [#allocation7]
        %481 = vst.msk [vmem:[%s480] sm:$0xff] %vm290, %v478
        %s482 = scalar_select %p269, 2, 5
        %s483 = smul.u32 %s482, 8
        %s484 = scalar_lea.vmem %s223, %s483 [#allocation2]
        %v485 = vld [vmem:[%s484] sm:$0xff]
        %v486 = vpack.c.bf16 %v473, %v473
        %v487 = vld [vmem:[%s232] sm:$0xf]
        %v488 = vld [vmem:[%s232 + $0x4] sm:$0xf]
        %v489 = vld [vmem:[%s232 + $0x8] sm:$0xf]
        %v490 = vld [vmem:[%s232 + $0xc] sm:$0xf]
        %492 = vrot.lane.b32.xlu0 %v486, 32
        %v493 = vpop.permute.xlu0 %492
        %v498 = vunpack.c.l.b16 %v487
        %v499 = vunpack.c.l.b16 %v488
        %v500 = vunpack.c.l.b16 %v489
        %v501 = vunpack.c.l.b16 %v490
        %v502 = vpack.c.b16 %v499, %v498
        %v503 = vpack.c.b16 %v501, %v500
        %v507 = vsel %vm290, %v493, 0
        %509 = vmatprep.subr.bf16.mxu0 0
        %510 = vmatpush1.bf16.msra.mxu0 %v502
        %511 = vmatprep.subr.bf16.mxu0 0
        %512 = vmatpush1.bf16.msra.mxu0 %v503
        %513 = vmatprep.subr.bf16.mxu0 0
        %514 = vmatpush1.bf16.msra.mxu0 0
        %515 = vmatprep.subr.bf16.mxu0 0
        %516 = vmatpush1.bf16.msra.mxu0 0
        %517 = vmatprep.subr.bf16.mxu0 0
        %518 = vmatpush1.bf16.msra.mxu0 0
        %519 = vmatprep.subr.bf16.mxu0 0
        %520 = vmatpush1.bf16.msra.mxu0 0
        %521 = vmatprep.subr.bf16.mxu0 0
        %522 = vmatpush1.bf16.msra.mxu0 0
        %523 = vmatprep.subr.bf16.mxu0 0
        %524 = vmatpush1.bf16.msra.mxu0 0
        %525 = vmatprep.subr.bf16.mxu0 0
        %526 = vmatpush1.bf16.msra.mxu0 0
        %527 = vmatprep.subr.bf16.mxu0 0
        %528 = vmatpush1.bf16.msra.mxu0 0
        %529 = vmatprep.subr.bf16.mxu0 0
        %530 = vmatpush1.bf16.msra.mxu0 0
        %531 = vmatprep.subr.bf16.mxu0 0
        %532 = vmatpush1.bf16.msra.mxu0 0
        %533 = vmatprep.subr.bf16.mxu0 0
        %534 = vmatpush1.bf16.msra.mxu0 0
        %535 = vmatprep.subr.bf16.mxu0 0
        %536 = vmatpush1.bf16.msra.mxu0 0
        %537 = vmatprep.subr.bf16.mxu0 0
        %538 = vmatpush1.bf16.msra.mxu0 0
        %539 = vmatprep.subr.bf16.mxu0 0
        %540 = vmatpush1.bf16.msra.mxu0 0
        %541 = vmatprep.mubr.bf16.mxu0 0
        %542 = vmatmul.mubr.bf16.gmra.mrb[0].mxu0 %v507
        %v543 = vpop.f32.mrb[0].mxu0
        %v544 = vadd.f32 0.0, %v543
        %v545 = vpop.f32.mrb[0].mxu0
        %v546 = vpop.f32.mrb[0].mxu0
        %v547 = vpop.f32.mrb[0].mxu0
        %548 = vdwg.mxu0
        %v549 = vadd.f32 %v485, %v544
        %v550 = vxor.u32 %v549, 2147483648
        %v551 = vmul.f32 %v550, 1.442695
        %v552 = vpow.pop %v551
        %v553 = vadd.f32 %v552, 1.0
        %v554 = vrcp.pop %v553
        %v555 = vmul.f32 1.0, %v554
        %v556 = vtanh.pop %v549
        %v557 = vmul.f32 %v555, %v474
        %559 = vrot.lane.b32.xlu0 %v556, 64
        %v560 = vpop.permute.xlu0 %559
        %v562 = vmul.f32 %v555, %v560
        %564 = vrot.lane.b32.xlu0 %v562, 32
        %v565 = vpop.permute.xlu0 %564
        %v567 = vadd.f32 %v557, %v565
        %v568 = vtanh.pop %v567
        %570 = vrot.lane.b32.xlu0 %v568, 64
        %v571 = vpop.permute.xlu0 %570
        %v573 = vmul.f32 %v555, %v571
        %v574 = vstv %s482
        %vm575 = vcmp.lt.s32.totalorder %v574, %v268
        %v576 = vsel %vm575, 1, 0
        %577 = vset.pattern.permute.xlu0 0
        %578 = vperm.xlu0 %577, %v576
        %v579 = vpop.permute.xlu0 %578
        %vm580 = vcmp.eq.s32.totalorder %v579, 1
        %v581 = vsel %vm580, %v573, %v473
        %v582 = vsel %vm580, %v567, %v474
        %v583 = vsel %vm580, %v573, 0.0
        %585 = vrot.lane.b32.xlu0 %v583, 32
        %v586 = vpop.permute.xlu0 %585
        %s588 = scalar_lea.vmem %s259, %s483 [#allocation7]
        %589 = vst.msk [vmem:[%s588] sm:$0xff] %vm290, %v586
        %s590 = scalar_select %p269, 3, 4
        %s591 = smul.u32 %s590, 8
        %s592 = scalar_lea.vmem %s223, %s591 [#allocation2]
        %v593 = vld [vmem:[%s592] sm:$0xff]
        %v594 = vpack.c.bf16 %v581, %v581
        %v595 = vld [vmem:[%s232] sm:$0xf]
        %v596 = vld [vmem:[%s232 + $0x4] sm:$0xf]
        %v597 = vld [vmem:[%s232 + $0x8] sm:$0xf]
        %v598 = vld [vmem:[%s232 + $0xc] sm:$0xf]
        %600 = vrot.lane.b32.xlu0 %v594, 32
        %v601 = vpop.permute.xlu0 %600
        %v606 = vunpack.c.l.b16 %v595
        %v607 = vunpack.c.l.b16 %v596
        %v608 = vunpack.c.l.b16 %v597
        %v609 = vunpack.c.l.b16 %v598
        %v610 = vpack.c.b16 %v607, %v606
        %v611 = vpack.c.b16 %v609, %v608
        %v615 = vsel %vm290, %v601, 0
        %617 = vmatprep.subr.bf16.mxu0 0
        %618 = vmatpush1.bf16.msra.mxu0 %v610
        %619 = vmatprep.subr.bf16.mxu0 0
        %620 = vmatpush1.bf16.msra.mxu0 %v611
        %621 = vmatprep.subr.bf16.mxu0 0
        %622 = vmatpush1.bf16.msra.mxu0 0
        %623 = vmatprep.subr.bf16.mxu0 0
        %624 = vmatpush1.bf16.msra.mxu0 0
        %625 = vmatprep.subr.bf16.mxu0 0
        %626 = vmatpush1.bf16.msra.mxu0 0
        %627 = vmatprep.subr.bf16.mxu0 0
        %628 = vmatpush1.bf16.msra.mxu0 0
        %629 = vmatprep.subr.bf16.mxu0 0
        %630 = vmatpush1.bf16.msra.mxu0 0
        %631 = vmatprep.subr.bf16.mxu0 0
        %632 = vmatpush1.bf16.msra.mxu0 0
        %633 = vmatprep.subr.bf16.mxu0 0
        %634 = vmatpush1.bf16.msra.mxu0 0
        %635 = vmatprep.subr.bf16.mxu0 0
        %636 = vmatpush1.bf16.msra.mxu0 0
        %637 = vmatprep.subr.bf16.mxu0 0
        %638 = vmatpush1.bf16.msra.mxu0 0
        %639 = vmatprep.subr.bf16.mxu0 0
        %640 = vmatpush1.bf16.msra.mxu0 0
        %641 = vmatprep.subr.bf16.mxu0 0
        %642 = vmatpush1.bf16.msra.mxu0 0
        %643 = vmatprep.subr.bf16.mxu0 0
        %644 = vmatpush1.bf16.msra.mxu0 0
        %645 = vmatprep.subr.bf16.mxu0 0
        %646 = vmatpush1.bf16.msra.mxu0 0
        %647 = vmatprep.subr.bf16.mxu0 0
        %648 = vmatpush1.bf16.msra.mxu0 0
        %649 = vmatprep.mubr.bf16.mxu0 0
        %650 = vmatmul.mubr.bf16.gmra.mrb[0].mxu0 %v615
        %v651 = vpop.f32.mrb[0].mxu0
        %v652 = vadd.f32 0.0, %v651
        %v653 = vpop.f32.mrb[0].mxu0
        %v654 = vpop.f32.mrb[0].mxu0
        %v655 = vpop.f32.mrb[0].mxu0
        %656 = vdwg.mxu0
        %v657 = vadd.f32 %v593, %v652
        %v658 = vxor.u32 %v657, 2147483648
        %v659 = vmul.f32 %v658, 1.442695
        %v660 = vpow.pop %v659
        %v661 = vadd.f32 %v660, 1.0
        %v662 = vrcp.pop %v661
        %v663 = vmul.f32 1.0, %v662
        %v664 = vtanh.pop %v657
        %v665 = vmul.f32 %v663, %v582
        %667 = vrot.lane.b32.xlu0 %v664, 64
        %v668 = vpop.permute.xlu0 %667
        %v670 = vmul.f32 %v663, %v668
        %672 = vrot.lane.b32.xlu0 %v670, 32
        %v673 = vpop.permute.xlu0 %672
        %v675 = vadd.f32 %v665, %v673
        %v676 = vtanh.pop %v675
        %678 = vrot.lane.b32.xlu0 %v676, 64
        %v679 = vpop.permute.xlu0 %678
        %v681 = vmul.f32 %v663, %v679
        %v682 = vstv %s590
        %vm683 = vcmp.lt.s32.totalorder %v682, %v268
        %v684 = vsel %vm683, 1, 0
        %685 = vset.pattern.permute.xlu0 0
        %686 = vperm.xlu0 %685, %v684
        %v687 = vpop.permute.xlu0 %686
        %vm688 = vcmp.eq.s32.totalorder %v687, 1
        %v689 = vsel %vm688, %v681, %v581
        %v690 = vsel %vm688, %v675, %v582
        %v691 = vsel %vm688, %v681, 0.0
        %693 = vrot.lane.b32.xlu0 %v691, 32
        %v694 = vpop.permute.xlu0 %693
        %s696 = scalar_lea.vmem %s259, %s591 [#allocation7]
        %697 = vst.msk [vmem:[%s696] sm:$0xff] %vm290, %v694
        %s698 = scalar_select %p269, 4, 3
        %s699 = smul.u32 %s698, 8
        %s700 = scalar_lea.vmem %s223, %s699 [#allocation2]
        %v701 = vld [vmem:[%s700] sm:$0xff]
        %v702 = vpack.c.bf16 %v689, %v689
        %v703 = vld [vmem:[%s232] sm:$0xf]
        %v704 = vld [vmem:[%s232 + $0x4] sm:$0xf]
        %v705 = vld [vmem:[%s232 + $0x8] sm:$0xf]
        %v706 = vld [vmem:[%s232 + $0xc] sm:$0xf]
        %708 = vrot.lane.b32.xlu0 %v702, 32
        %v709 = vpop.permute.xlu0 %708
        %v714 = vunpack.c.l.b16 %v703
        %v715 = vunpack.c.l.b16 %v704
        %v716 = vunpack.c.l.b16 %v705
        %v717 = vunpack.c.l.b16 %v706
        %v718 = vpack.c.b16 %v715, %v714
        %v719 = vpack.c.b16 %v717, %v716
        %v723 = vsel %vm290, %v709, 0
        %725 = vmatprep.subr.bf16.mxu0 0
        %726 = vmatpush1.bf16.msra.mxu0 %v718
        %727 = vmatprep.subr.bf16.mxu0 0
        %728 = vmatpush1.bf16.msra.mxu0 %v719
        %729 = vmatprep.subr.bf16.mxu0 0
        %730 = vmatpush1.bf16.msra.mxu0 0
        %731 = vmatprep.subr.bf16.mxu0 0
        %732 = vmatpush1.bf16.msra.mxu0 0
        %733 = vmatprep.subr.bf16.mxu0 0
        %734 = vmatpush1.bf16.msra.mxu0 0
        %735 = vmatprep.subr.bf16.mxu0 0
        %736 = vmatpush1.bf16.msra.mxu0 0
        %737 = vmatprep.subr.bf16.mxu0 0
        %738 = vmatpush1.bf16.msra.mxu0 0
        %739 = vmatprep.subr.bf16.mxu0 0
        %740 = vmatpush1.bf16.msra.mxu0 0
        %741 = vmatprep.subr.bf16.mxu0 0
        %742 = vmatpush1.bf16.msra.mxu0 0
        %743 = vmatprep.subr.bf16.mxu0 0
        %744 = vmatpush1.bf16.msra.mxu0 0
        %745 = vmatprep.subr.bf16.mxu0 0
        %746 = vmatpush1.bf16.msra.mxu0 0
        %747 = vmatprep.subr.bf16.mxu0 0
        %748 = vmatpush1.bf16.msra.mxu0 0
        %749 = vmatprep.subr.bf16.mxu0 0
        %750 = vmatpush1.bf16.msra.mxu0 0
        %751 = vmatprep.subr.bf16.mxu0 0
        %752 = vmatpush1.bf16.msra.mxu0 0
        %753 = vmatprep.subr.bf16.mxu0 0
        %754 = vmatpush1.bf16.msra.mxu0 0
        %755 = vmatprep.subr.bf16.mxu0 0
        %756 = vmatpush1.bf16.msra.mxu0 0
        %757 = vmatprep.mubr.bf16.mxu0 0
        %758 = vmatmul.mubr.bf16.gmra.mrb[0].mxu0 %v723
        %v759 = vpop.f32.mrb[0].mxu0
        %v760 = vadd.f32 0.0, %v759
        %v761 = vpop.f32.mrb[0].mxu0
        %v762 = vpop.f32.mrb[0].mxu0
        %v763 = vpop.f32.mrb[0].mxu0
        %764 = vdwg.mxu0
        %v765 = vadd.f32 %v701, %v760
        %v766 = vxor.u32 %v765, 2147483648
        %v767 = vmul.f32 %v766, 1.442695
        %v768 = vpow.pop %v767
        %v769 = vadd.f32 %v768, 1.0
        %v770 = vrcp.pop %v769
        %v771 = vmul.f32 1.0, %v770
        %v772 = vtanh.pop %v765
        %v773 = vmul.f32 %v771, %v690
        %775 = vrot.lane.b32.xlu0 %v772, 64
        %v776 = vpop.permute.xlu0 %775
        %v778 = vmul.f32 %v771, %v776
        %780 = vrot.lane.b32.xlu0 %v778, 32
        %v781 = vpop.permute.xlu0 %780
        %v783 = vadd.f32 %v773, %v781
        %v784 = vtanh.pop %v783
        %786 = vrot.lane.b32.xlu0 %v784, 64
        %v787 = vpop.permute.xlu0 %786
        %v789 = vmul.f32 %v771, %v787
        %v790 = vstv %s698
        %vm791 = vcmp.lt.s32.totalorder %v790, %v268
        %v792 = vsel %vm791, 1, 0
        %793 = vset.pattern.permute.xlu0 0
        %794 = vperm.xlu0 %793, %v792
        %v795 = vpop.permute.xlu0 %794
        %vm796 = vcmp.eq.s32.totalorder %v795, 1
        %v797 = vsel %vm796, %v789, %v689
        %v798 = vsel %vm796, %v783, %v690
        %v799 = vsel %vm796, %v789, 0.0
        %801 = vrot.lane.b32.xlu0 %v799, 32
        %v802 = vpop.permute.xlu0 %801
        %s804 = scalar_lea.vmem %s259, %s699 [#allocation7]
        %805 = vst.msk [vmem:[%s804] sm:$0xff] %vm290, %v802
        %s806 = scalar_select %p269, 5, 2
        %s807 = smul.u32 %s806, 8
        %s808 = scalar_lea.vmem %s223, %s807 [#allocation2]
        %v809 = vld [vmem:[%s808] sm:$0xff]
        %v810 = vpack.c.bf16 %v797, %v797
        %v811 = vld [vmem:[%s232] sm:$0xf]
        %v812 = vld [vmem:[%s232 + $0x4] sm:$0xf]
        %v813 = vld [vmem:[%s232 + $0x8] sm:$0xf]
        %v814 = vld [vmem:[%s232 + $0xc] sm:$0xf]
        %816 = vrot.lane.b32.xlu0 %v810, 32
        %v817 = vpop.permute.xlu0 %816
        %v822 = vunpack.c.l.b16 %v811
        %v823 = vunpack.c.l.b16 %v812
        %v824 = vunpack.c.l.b16 %v813
        %v825 = vunpack.c.l.b16 %v814
        %v826 = vpack.c.b16 %v823, %v822
        %v827 = vpack.c.b16 %v825, %v824
        %v831 = vsel %vm290, %v817, 0
        %833 = vmatprep.subr.bf16.mxu0 0
        %834 = vmatpush1.bf16.msra.mxu0 %v826
        %835 = vmatprep.subr.bf16.mxu0 0
        %836 = vmatpush1.bf16.msra.mxu0 %v827
        %837 = vmatprep.subr.bf16.mxu0 0
        %838 = vmatpush1.bf16.msra.mxu0 0
        %839 = vmatprep.subr.bf16.mxu0 0
        %840 = vmatpush1.bf16.msra.mxu0 0
        %841 = vmatprep.subr.bf16.mxu0 0
        %842 = vmatpush1.bf16.msra.mxu0 0
        %843 = vmatprep.subr.bf16.mxu0 0
        %844 = vmatpush1.bf16.msra.mxu0 0
        %845 = vmatprep.subr.bf16.mxu0 0
        %846 = vmatpush1.bf16.msra.mxu0 0
        %847 = vmatprep.subr.bf16.mxu0 0
        %848 = vmatpush1.bf16.msra.mxu0 0
        %849 = vmatprep.subr.bf16.mxu0 0
        %850 = vmatpush1.bf16.msra.mxu0 0
        %851 = vmatprep.subr.bf16.mxu0 0
        %852 = vmatpush1.bf16.msra.mxu0 0
        %853 = vmatprep.subr.bf16.mxu0 0
        %854 = vmatpush1.bf16.msra.mxu0 0
        %855 = vmatprep.subr.bf16.mxu0 0
        %856 = vmatpush1.bf16.msra.mxu0 0
        %857 = vmatprep.subr.bf16.mxu0 0
        %858 = vmatpush1.bf16.msra.mxu0 0
        %859 = vmatprep.subr.bf16.mxu0 0
        %860 = vmatpush1.bf16.msra.mxu0 0
        %861 = vmatprep.subr.bf16.mxu0 0
        %862 = vmatpush1.bf16.msra.mxu0 0
        %863 = vmatprep.subr.bf16.mxu0 0
        %864 = vmatpush1.bf16.msra.mxu0 0
        %865 = vmatprep.mubr.bf16.mxu0 0
        %866 = vmatmul.mubr.bf16.gmra.mrb[0].mxu0 %v831
        %v867 = vpop.f32.mrb[0].mxu0
        %v868 = vadd.f32 0.0, %v867
        %v869 = vpop.f32.mrb[0].mxu0
        %v870 = vpop.f32.mrb[0].mxu0
        %v871 = vpop.f32.mrb[0].mxu0
        %872 = vdwg.mxu0
        %v873 = vadd.f32 %v809, %v868
        %v874 = vxor.u32 %v873, 2147483648
        %v875 = vmul.f32 %v874, 1.442695
        %v876 = vpow.pop %v875
        %v877 = vadd.f32 %v876, 1.0
        %v878 = vrcp.pop %v877
        %v879 = vmul.f32 1.0, %v878
        %v880 = vtanh.pop %v873
        %v881 = vmul.f32 %v879, %v798
        %883 = vrot.lane.b32.xlu0 %v880, 64
        %v884 = vpop.permute.xlu0 %883
        %v886 = vmul.f32 %v879, %v884
        %888 = vrot.lane.b32.xlu0 %v886, 32
        %v889 = vpop.permute.xlu0 %888
        %v891 = vadd.f32 %v881, %v889
        %v892 = vtanh.pop %v891
        %894 = vrot.lane.b32.xlu0 %v892, 64
        %v895 = vpop.permute.xlu0 %894
        %v897 = vmul.f32 %v879, %v895
        %v898 = vstv %s806
        %vm899 = vcmp.lt.s32.totalorder %v898, %v268
        %v900 = vsel %vm899, 1, 0
        %901 = vset.pattern.permute.xlu0 0
        %902 = vperm.xlu0 %901, %v900
        %v903 = vpop.permute.xlu0 %902
        %vm904 = vcmp.eq.s32.totalorder %v903, 1
        %v905 = vsel %vm904, %v897, %v797
        %v906 = vsel %vm904, %v891, %v798
        %v907 = vsel %vm904, %v897, 0.0
        %909 = vrot.lane.b32.xlu0 %v907, 32
        %v910 = vpop.permute.xlu0 %909
        %s912 = scalar_lea.vmem %s259, %s807 [#allocation7]
        %913 = vst.msk [vmem:[%s912] sm:$0xff] %vm290, %v910
        %s914 = scalar_select %p269, 6, 1
        %s915 = smul.u32 %s914, 8
        %s916 = scalar_lea.vmem %s223, %s915 [#allocation2]
        %v917 = vld [vmem:[%s916] sm:$0xff]
        %v918 = vpack.c.bf16 %v905, %v905
        %v919 = vld [vmem:[%s232] sm:$0xf]
        %v920 = vld [vmem:[%s232 + $0x4] sm:$0xf]
        %v921 = vld [vmem:[%s232 + $0x8] sm:$0xf]
        %v922 = vld [vmem:[%s232 + $0xc] sm:$0xf]
        %924 = vrot.lane.b32.xlu0 %v918, 32
        %v925 = vpop.permute.xlu0 %924
        %v930 = vunpack.c.l.b16 %v919
        %v931 = vunpack.c.l.b16 %v920
        %v932 = vunpack.c.l.b16 %v921
        %v933 = vunpack.c.l.b16 %v922
        %v934 = vpack.c.b16 %v931, %v930
        %v935 = vpack.c.b16 %v933, %v932
        %v939 = vsel %vm290, %v925, 0
        %941 = vmatprep.subr.bf16.mxu0 0
        %942 = vmatpush1.bf16.msra.mxu0 %v934
        %943 = vmatprep.subr.bf16.mxu0 0
        %944 = vmatpush1.bf16.msra.mxu0 %v935
        %945 = vmatprep.subr.bf16.mxu0 0
        %946 = vmatpush1.bf16.msra.mxu0 0
        %947 = vmatprep.subr.bf16.mxu0 0
        %948 = vmatpush1.bf16.msra.mxu0 0
        %949 = vmatprep.subr.bf16.mxu0 0
        %950 = vmatpush1.bf16.msra.mxu0 0
        %951 = vmatprep.subr.bf16.mxu0 0
        %952 = vmatpush1.bf16.msra.mxu0 0
        %953 = vmatprep.subr.bf16.mxu0 0
        %954 = vmatpush1.bf16.msra.mxu0 0
        %955 = vmatprep.subr.bf16.mxu0 0
        %956 = vmatpush1.bf16.msra.mxu0 0
        %957 = vmatprep.subr.bf16.mxu0 0
        %958 = vmatpush1.bf16.msra.mxu0 0
        %959 = vmatprep.subr.bf16.mxu0 0
        %960 = vmatpush1.bf16.msra.mxu0 0
        %961 = vmatprep.subr.bf16.mxu0 0
        %962 = vmatpush1.bf16.msra.mxu0 0
        %963 = vmatprep.subr.bf16.mxu0 0
        %964 = vmatpush1.bf16.msra.mxu0 0
        %965 = vmatprep.subr.bf16.mxu0 0
        %966 = vmatpush1.bf16.msra.mxu0 0
        %967 = vmatprep.subr.bf16.mxu0 0
        %968 = vmatpush1.bf16.msra.mxu0 0
        %969 = vmatprep.subr.bf16.mxu0 0
        %970 = vmatpush1.bf16.msra.mxu0 0
        %971 = vmatprep.subr.bf16.mxu0 0
        %972 = vmatpush1.bf16.msra.mxu0 0
        %973 = vmatprep.mubr.bf16.mxu0 0
        %974 = vmatmul.mubr.bf16.gmra.mrb[0].mxu0 %v939
        %v975 = vpop.f32.mrb[0].mxu0
        %v976 = vadd.f32 0.0, %v975
        %v977 = vpop.f32.mrb[0].mxu0
        %v978 = vpop.f32.mrb[0].mxu0
        %v979 = vpop.f32.mrb[0].mxu0
        %980 = vdwg.mxu0
        %v981 = vadd.f32 %v917, %v976
        %v982 = vxor.u32 %v981, 2147483648
        %v983 = vmul.f32 %v982, 1.442695
        %v984 = vpow.pop %v983
        %v985 = vadd.f32 %v984, 1.0
        %v986 = vrcp.pop %v985
        %v987 = vmul.f32 1.0, %v986
        %v988 = vtanh.pop %v981
        %v989 = vmul.f32 %v987, %v906
        %991 = vrot.lane.b32.xlu0 %v988, 64
        %v992 = vpop.permute.xlu0 %991
        %v994 = vmul.f32 %v987, %v992
        %996 = vrot.lane.b32.xlu0 %v994, 32
        %v997 = vpop.permute.xlu0 %996
        %v999 = vadd.f32 %v989, %v997
        %v1000 = vtanh.pop %v999
        %1002 = vrot.lane.b32.xlu0 %v1000, 64
        %v1003 = vpop.permute.xlu0 %1002
        %v1005 = vmul.f32 %v987, %v1003
        %v1006 = vstv %s914
        %vm1007 = vcmp.lt.s32.totalorder %v1006, %v268
        %v1008 = vsel %vm1007, 1, 0
        %1009 = vset.pattern.permute.xlu0 0
        %1010 = vperm.xlu0 %1009, %v1008
        %v1011 = vpop.permute.xlu0 %1010
        %vm1012 = vcmp.eq.s32.totalorder %v1011, 1
        %v1013 = vsel %vm1012, %v1005, %v905
        %v1014 = vsel %vm1012, %v999, %v906
        %v1015 = vsel %vm1012, %v1005, 0.0
        %1017 = vrot.lane.b32.xlu0 %v1015, 32
        %v1018 = vpop.permute.xlu0 %1017
        %s1020 = scalar_lea.vmem %s259, %s915 [#allocation7]
        %1021 = vst.msk [vmem:[%s1020] sm:$0xff] %vm290, %v1018
        %s1022 = scalar_select %p269, 7, 0
        %s1023 = smul.u32 %s1022, 8
        %s1024 = scalar_lea.vmem %s223, %s1023 [#allocation2]
        %v1025 = vld [vmem:[%s1024] sm:$0xff]
        %v1026 = vpack.c.bf16 %v1013, %v1013
        %v1027 = vld [vmem:[%s232] sm:$0xf]
        %v1028 = vld [vmem:[%s232 + $0x4] sm:$0xf]
        %v1029 = vld [vmem:[%s232 + $0x8] sm:$0xf]
        %v1030 = vld [vmem:[%s232 + $0xc] sm:$0xf]
        %1032 = vrot.lane.b32.xlu0 %v1026, 32
        %v1033 = vpop.permute.xlu0 %1032
        %v1038 = vunpack.c.l.b16 %v1027
        %v1039 = vunpack.c.l.b16 %v1028
        %v1040 = vunpack.c.l.b16 %v1029
        %v1041 = vunpack.c.l.b16 %v1030
        %v1042 = vpack.c.b16 %v1039, %v1038
        %v1043 = vpack.c.b16 %v1041, %v1040
        %v1047 = vsel %vm290, %v1033, 0
        %1049 = vmatprep.subr.bf16.mxu0 0
        %1050 = vmatpush1.bf16.msra.mxu0 %v1042
        %1051 = vmatprep.subr.bf16.mxu0 0
        %1052 = vmatpush1.bf16.msra.mxu0 %v1043
        %1053 = vmatprep.subr.bf16.mxu0 0
        %1054 = vmatpush1.bf16.msra.mxu0 0
        %1055 = vmatprep.subr.bf16.mxu0 0
        %1056 = vmatpush1.bf16.msra.mxu0 0
        %1057 = vmatprep.subr.bf16.mxu0 0
        %1058 = vmatpush1.bf16.msra.mxu0 0
        %1059 = vmatprep.subr.bf16.mxu0 0
        %1060 = vmatpush1.bf16.msra.mxu0 0
        %1061 = vmatprep.subr.bf16.mxu0 0
        %1062 = vmatpush1.bf16.msra.mxu0 0
        %1063 = vmatprep.subr.bf16.mxu0 0
        %1064 = vmatpush1.bf16.msra.mxu0 0
        %1065 = vmatprep.subr.bf16.mxu0 0
        %1066 = vmatpush1.bf16.msra.mxu0 0
        %1067 = vmatprep.subr.bf16.mxu0 0
        %1068 = vmatpush1.bf16.msra.mxu0 0
        %1069 = vmatprep.subr.bf16.mxu0 0
        %1070 = vmatpush1.bf16.msra.mxu0 0
        %1071 = vmatprep.subr.bf16.mxu0 0
        %1072 = vmatpush1.bf16.msra.mxu0 0
        %1073 = vmatprep.subr.bf16.mxu0 0
        %1074 = vmatpush1.bf16.msra.mxu0 0
        %1075 = vmatprep.subr.bf16.mxu0 0
        %1076 = vmatpush1.bf16.msra.mxu0 0
        %1077 = vmatprep.subr.bf16.mxu0 0
        %1078 = vmatpush1.bf16.msra.mxu0 0
        %1079 = vmatprep.subr.bf16.mxu0 0
        %1080 = vmatpush1.bf16.msra.mxu0 0
        %1081 = vmatprep.mubr.bf16.mxu0 0
        %1082 = vmatmul.mubr.bf16.gmra.mrb[0].mxu0 %v1047
        %v1083 = vpop.f32.mrb[0].mxu0
        %v1084 = vadd.f32 0.0, %v1083
        %v1085 = vpop.f32.mrb[0].mxu0
        %v1086 = vpop.f32.mrb[0].mxu0
        %v1087 = vpop.f32.mrb[0].mxu0
        %1088 = vdwg.mxu0
        %v1089 = vadd.f32 %v1025, %v1084
        %v1090 = vxor.u32 %v1089, 2147483648
        %v1091 = vmul.f32 %v1090, 1.442695
        %v1092 = vpow.pop %v1091
        %v1093 = vadd.f32 %v1092, 1.0
        %v1094 = vrcp.pop %v1093
        %v1095 = vmul.f32 1.0, %v1094
        %v1096 = vtanh.pop %v1089
        %v1097 = vmul.f32 %v1095, %v1014
        %1099 = vrot.lane.b32.xlu0 %v1096, 64
        %v1100 = vpop.permute.xlu0 %1099
        %v1102 = vmul.f32 %v1095, %v1100
        %1104 = vrot.lane.b32.xlu0 %v1102, 32
        %v1105 = vpop.permute.xlu0 %1104
        %v1107 = vadd.f32 %v1097, %v1105
        %v1108 = vtanh.pop %v1107
        %1110 = vrot.lane.b32.xlu0 %v1108, 64
        %v1111 = vpop.permute.xlu0 %1110
        %v1113 = vmul.f32 %v1095, %v1111
        %v1114 = vstv %s1022
        %vm1115 = vcmp.lt.s32.totalorder %v1114, %v268
        %v1116 = vsel %vm1115, 1, 0
        %1117 = vset.pattern.permute.xlu0 0
        %1118 = vperm.xlu0 %1117, %v1116
        %v1119 = vpop.permute.xlu0 %1118
        %vm1120 = vcmp.eq.s32.totalorder %v1119, 1
        %v1121 = vsel %vm1120, %v1113, %v1013
        %v1122 = vsel %vm1120, %v1113, 0.0
        %1124 = vrot.lane.b32.xlu0 %v1122, 32
        %v1125 = vpop.permute.xlu0 %1124
        %s1127 = scalar_lea.vmem %s259, %s1023 [#allocation7]
        %1128 = vst.msk [vmem:[%s1127] sm:$0xff] %vm290, %v1125
        %1130 = vrot.lane.b32.xlu0 %v1121, 32
        %v1131 = vpop.permute.xlu0 %1130
        %1133 = vst.msk [vmem:[%s266] sm:$0xff] %vm290, %v1131
        %s1134 = sand.u32 %s109, 1
        %s1135 = scalar_lea.sflag [#allocation4], %s1134
        %s1136 = sand.u32 %s109, 1
        %s1137 = smul.addr %s1136, 64
        %s1138 = scalar_lea.vmem [#allocation7], %s1137
        %s1139 = sand.u32 %s135, 1
        %s1140 = scalar_lea.sflag [#allocation9], %s1139
        %s1141 = sand.u32 %s135, 1
        %s1142 = smul.addr %s1141, 8
        %s1143 = scalar_lea.vmem [#allocation8], %s1142
        // Predicated region
        $region41: #{tpu_custom_call.1} parent=31 // pred_check
          %p1144 = pneg %p119
        $region42: #{tpu_custom_call.1} parent=31 // pred_check_branch
          %1146 = sbr.rel (%p1144) target = $region44
        $region43: #{tpu_custom_call.1} parent=31 // pred_region
          %s1148 = ssub.s32 1024, 1024
          %1149 = vsyncadd %s1135, %s1148
          %s1150 = smul.addr %s28, 8
          %s1151 = smul.addr %s1150, 128
          %s1152 = scalar_lea.hbm %s3, %s1151
          %s1153 = sshll.u32 %s1138, 4
          %s1154 = int_to_ptr.vmem [resolvable:$true] %s1153
          %1159 = dma.vmem_to_hbm [thread:$0]  %s1154, 1024, %s1152, %s1135, 128, 128, 8
        $region44: #{tpu_custom_call.1} parent=31 // pred_fallthru
          _
        // Predicated region
        $region45: #{tpu_custom_call.1} parent=31 // pred_check
          %p1160 = pneg %p145
        $region46: #{tpu_custom_call.1} parent=31 // pred_check_branch
          %1162 = sbr.rel (%p1160) target = $region48
        $region47: #{tpu_custom_call.1} parent=31 // pred_region
          %s1164 = ssub.s32 128, 128
          %1165 = vsyncadd %s1140, %s1164
          %s1166 = smul.addr %s28, 128
          %s1167 = scalar_lea.hbm %s4, %s1166
          %s1169 = sshll.u32 %s1143, 4
          %s1170 = int_to_ptr.vmem [resolvable:$true] %s1169
          %1172 = dma.vmem_to_hbm [thread:$0]  %s1170, 128, %s1167, %s1140
        $region48: #{tpu_custom_call.1} parent=31 // pred_fallthru
          _
      $region32: #{tpu_custom_call.1} parent=5 // pred_fallthru
        _
      %p1173 = scmp.le.s32.totalorder 2, %s23
      // Predicated region
      $region49: #{tpu_custom_call.1} parent=5 // pred_check
        %p1174 = pneg %p1173
      $region50: #{tpu_custom_call.1} parent=5 // pred_check_branch
        %1176 = sbr.rel (%p1174) target = $region52
      $region51: #{tpu_custom_call.1} parent=5 // pred_region
        %s1177 = ssub.s32 %s23, 2
        // Predicated region
        $region53: #{tpu_custom_call.1} parent=51 // pred_check
          %p1178 = pneg %p125
        $region54: #{tpu_custom_call.1} parent=51 // pred_check_branch
          %1180 = sbr.rel (%p1178) target = $region56
        $region55: #{tpu_custom_call.1} parent=51 // pred_region
          %s1181 = sand.u32 %s110, 1
          %s1182 = scalar_lea.sflag [#allocation4], %s1181
          %s1183 = sand.u32 %s110, 1
          %s1184 = smul.addr %s1183, 64
          %s1185 = scalar_lea.vmem [#allocation7], %s1184
          %1186 = dma.done %s1182, 1024
        $region56: #{tpu_custom_call.1} parent=51 // pred_fallthru
          _
        // Predicated region
        $region57: #{tpu_custom_call.1} parent=51 // pred_check
          %p1187 = pneg %p151
        $region58: #{tpu_custom_call.1} parent=51 // pred_check_branch
          %1189 = sbr.rel (%p1187) target = $region60
        $region59: #{tpu_custom_call.1} parent=51 // pred_region
          %s1190 = sand.u32 %s136, 1
          %s1191 = scalar_lea.sflag [#allocation9], %s1190
          %s1192 = sand.u32 %s136, 1
          %s1193 = smul.addr %s1192, 8
          %s1194 = scalar_lea.vmem [#allocation8], %s1193
          %1195 = dma.done %s1191, 128
        $region60: #{tpu_custom_call.1} parent=51 // pred_fallthru
          _
      $region52: #{tpu_custom_call.1} parent=5 // pred_fallthru
        _
    $region6: #{tpu_custom_call.1} parent=1 // loop_footer
      %s27 = sadd.s32 1, %s23
    $region7: #{tpu_custom_call.1} parent=1 // loop_footer_branch
      %22 = sbr.rel target = $region3
    $region8: #{tpu_custom_call.1} parent=1 // loop_exit
      _
    %1196 = vsyncpa [#allocation3], 1
    %s1197 = scalar_lea.sflag [#allocation3], 1
    %1198 = vsyncpa %s1197, 1
    %1199 = vsyncpa [#allocation6], 1
    %s1200 = scalar_lea.sflag [#allocation6], 1
    %1201 = vsyncpa %s1200, 1
    %1202 = vsyncpa [#allocation4], 1
    %s1203 = scalar_lea.sflag [#allocation4], 1
    %1204 = vsyncpa %s1203, 1
    %1205 = vsyncpa [#allocation9], 1
    %s1206 = scalar_lea.sflag [#allocation9], 1
    %1207 = vsyncpa %s1206, 1

</llo_original>
